<compile_context>
chip_gen: v5e
topology: v5e:2x2
jax: 0.10.0
libtpu: 0.0.40
codegen_flags: <defaults>
</compile_context>

<pallas_src>
import functools

import jax
import jax.numpy as jnp
from jax.experimental import pallas as pl
from jax.experimental.pallas import tpu as pltpu


def _fused_kernel(*refs, TD, Cout, H, W):
    """refs = [mask(9,1,HW), w1(3,Cout,Cin), w2(Cout,9*Cout),
               x_0..x_{TD+1} each (1,1,Cin,HW), out(1,TD,Cout,HW)]"""
    HW = H * W
    mask_ref = refs[0]
    w1_ref = refs[1]
    w2_ref = refs[2]
    x_refs = refs[3:3 + TD + 2]
    o_ref = refs[3 + TD + 2]

    pad = W + 1                                   # max |flat shift| of a 3x3 tap
    zpad = jnp.zeros((Cout, pad), jnp.float32)
    w2 = w2_ref[...]                              # (Cout, 9*Cout)

    for t in range(TD):                           # TD output depth slices / step
        # ---- pw_conv: depth kernel of 3, f32 accumulation on the MXU ----
        acc = jnp.zeros((Cout, HW), jnp.float32)
        for kd in range(3):
            acc = acc + jnp.dot(
                w1_ref[kd], x_refs[t + kd][0, 0],
                preferred_element_type=jnp.float32)

        # ---- dw_conv: 3x3 spatial conv on the flattened HW axis ----
        # shifted[p] = acc[p + s]; zero bands handle the H boundary, the
        # per-tap mask kills row-wraparound at the W boundary.
        acc_pad = jnp.concatenate([zpad, acc, zpad], axis=1)   # (Cout, HW+2*(W+1))
        parts = []
        tap = 0
        for dh in (-1, 0, 1):
            for dw in (-1, 0, 1):
                s = dh * W + dw
                shifted = acc_pad[:, pad + s: pad + s + HW]    # (Cout, HW)
                parts.append(shifted * mask_ref[tap])          # mask: (1, HW)
                tap += 1
        ycol = jnp.concatenate(parts, axis=0)                  # (9*Cout, HW)

        o_ref[0, t] = jnp.dot(
            w2, ycol, preferred_element_type=jnp.float32).astype(o_ref.dtype)


def sepconv_pd_forward(x, w1, w2, *, depth_tile=4):
    """x: (N, Cin, D, H, W); w1: (Cout, Cin, 3); w2: (Cout, Cout, 3, 3).
    Returns (N, Cout, D, H, W) — SepConv_PD forward (k=3, s=1, p=1, no bias)."""
    N, Cin, D, H, W = x.shape
    Cout = w1.shape[0]
    HW = H * W
    TD = max(1, min(depth_tile, D))
    D_pad = ((D + TD - 1) // TD) * TD

    # (N, Cin, D, H, W) -> (N, D, Cin, HW); depth zero-pad: 1 front, 1+(D_pad-D) back
    x_t = jnp.transpose(x, (0, 2, 1, 3, 4)).reshape(N, D, Cin, HW)
    x_p = jnp.pad(x_t, ((0, 0), (1, 1 + D_pad - D), (0, 0), (0, 0)))

    # Weight layouts matched to the in-kernel tap orders.
    w1_k = jnp.transpose(w1, (2, 0, 1))                              # (3, Cout, Cin)
    w2_flat = jnp.transpose(w2, (0, 2, 3, 1)).reshape(Cout, 9 * Cout)  # tap-major

    # Per-tap validity masks over flat HW positions (tap order kh-major, kw-minor).
    p = jnp.arange(HW, dtype=jnp.int32)
    hh = p // W
    ww = p % W
    rows = []
    for dh in (-1, 0, 1):
        for dw in (-1, 0, 1):
            rows.append((hh + dh >= 0) & (hh + dh < H)
                        & (ww + dw >= 0) & (ww + dw < W))
    masks = jnp.stack(rows).astype(jnp.float32).reshape(9, 1, HW)

    kernel = functools.partial(_fused_kernel, TD=TD, Cout=Cout, H=H, W=W)

    # TD+2 shifted depth views of the same padded input (depth halo of 1 each side).
    x_specs = [
        pl.BlockSpec((1, 1, Cin, HW),
                     (lambda n, db, k=k: (n, db * TD + k, 0, 0)))
        for k in range(TD + 2)
    ]

    out = pl.pallas_call(
        kernel,
        out_shape=jax.ShapeDtypeStruct((N, D_pad, Cout, HW), x.dtype),
        grid=(N, D_pad // TD),
        in_specs=[
            pl.BlockSpec((9, 1, HW), lambda n, db: (0, 0, 0)),
            pl.BlockSpec((3, Cout, Cin), lambda n, db: (0, 0, 0)),
            pl.BlockSpec((Cout, 9 * Cout), lambda n, db: (0, 0)),
        ] + x_specs,
        out_specs=pl.BlockSpec((1, TD, Cout, HW), lambda n, db: (n, db, 0, 0)),
        compiler_params=pltpu.CompilerParams(
            dimension_semantics=("parallel", "parallel")),
    )(masks, w1_k, w2_flat, *([x_p] * (TD + 2)))

    # Drop padded depth slices, back to NCDHW.
    out = out[:, :D].reshape(N, D, Cout, H, W)
    return jnp.transpose(out, (0, 2, 1, 3, 4))


def _reference(x, w1, w2):
    """Pure-jnp reference of SepConv_PD forward (for verification)."""
    N, Cin, D, H, W = x.shape
    x_pad = jnp.pad(x, ((0, 0), (0, 0), (1, 1), (0, 0), (0, 0)))
    xs = jnp.stack([x_pad[:, :, kd:kd + D] for kd in range(3)], axis=2)
    y = jnp.einsum("ock,nckdhw->nodhw", w1, xs)                      # pw_conv
    y_pad = jnp.pad(y, ((0, 0), (0, 0), (0, 0), (1, 1), (1, 1)))
    out = jnp.zeros_like(y)
    for kh in range(3):
        for kw in range(3):
            out = out + jnp.einsum(
                "oi,nidhw->nodhw", w2[:, :, kh, kw],
                y_pad[:, :, :, kh:kh + H, kw:kw + W])                # dw_conv
    return out


if __name__ == "__main__":
    N, Cin, Cout, D, H, W = 2, 4, 8, 6, 16, 16   # k=3, s=1, p=1, bias=False

    key = jax.random.PRNGKey(0)
    kx, k1, k2 = jax.random.split(key, 3)
    x = jax.random.normal(kx, (N, Cin, D, H, W), dtype=jnp.float32)
    # Conv3d weights with singleton kernel dims squeezed out:
    #   pw_conv.weight: (Cout, Cin, 3, 1, 1) -> (Cout, Cin, 3)
    #   dw_conv.weight: (Cout, Cout, 1, 3, 3) -> (Cout, Cout, 3, 3)
    w1 = 0.1 * jax.random.normal(k1, (Cout, Cin, 3), dtype=jnp.float32)
    w2 = 0.1 * jax.random.normal(k2, (Cout, Cout, 3, 3), dtype=jnp.float32)

    fwd = jax.jit(sepconv_pd_forward)
    out = jax.block_until_ready(fwd(x, w1, w2))
    ref = jax.block_until_ready(_reference(x, w1, w2))

    assert out.shape == (N, Cout, D, H, W), out.shape
    assert jnp.allclose(out, ref, rtol=1e-4, atol=1e-4), float(
        jnp.max(jnp.abs(out - ref)))
    print("KERNEL_OK")
</pallas_src>

<mosaic_0001>
module attributes {stable_mosaic.version = 11 : i64} {
  func.func @_fused_kernel(%arg0: i32, %arg1: i32, %arg2: memref<9x1x256xf32, #tpu.memory_space<vmem>>, %arg3: memref<3x8x4xf32, #tpu.memory_space<vmem>>, %arg4: memref<8x72xf32, #tpu.memory_space<vmem>>, %arg5: memref<1x1x4x256xf32, #tpu.memory_space<vmem>>, %arg6: memref<1x1x4x256xf32, #tpu.memory_space<vmem>>, %arg7: memref<1x1x4x256xf32, #tpu.memory_space<vmem>>, %arg8: memref<1x1x4x256xf32, #tpu.memory_space<vmem>>, %arg9: memref<1x1x4x256xf32, #tpu.memory_space<vmem>>, %arg10: memref<1x1x4x256xf32, #tpu.memory_space<vmem>>, %arg11: memref<1x4x8x256xf32, #tpu.memory_space<vmem>>) attributes {dimension_semantics = [#tpu.dimension_semantics<parallel>, #tpu.dimension_semantics<parallel>], iteration_bounds = array<i64: 2, 2>, scalar_prefetch = 0 : i64, scratch_operands = 0 : i64, tpu.core_type = #tpu.core_type<tc>, window_params = [{pipeline_mode = #tpu.pipeline_mode<synchronous>, transform_indices = @transform_0, window_bounds = array<i64: 9, 1, 256>}, {pipeline_mode = #tpu.pipeline_mode<synchronous>, transform_indices = @transform_1, window_bounds = array<i64: 3, 8, 4>}, {pipeline_mode = #tpu.pipeline_mode<synchronous>, transform_indices = @transform_2, window_bounds = array<i64: 8, 72>}, {transform_indices = @transform_3, window_bounds = array<i64: 1, 1, 4, 256>}, {transform_indices = @transform_4, window_bounds = array<i64: 1, 1, 4, 256>}, {transform_indices = @transform_5, window_bounds = array<i64: 1, 1, 4, 256>}, {transform_indices = @transform_6, window_bounds = array<i64: 1, 1, 4, 256>}, {transform_indices = @transform_7, window_bounds = array<i64: 1, 1, 4, 256>}, {transform_indices = @transform_8, window_bounds = array<i64: 1, 1, 4, 256>}, {transform_indices = @transform_9, window_bounds = array<i64: 1, 4, 8, 256>}]} {
    %cst = arith.constant 0.000000e+00 : f32
    %0 = vector.broadcast %cst : f32 to vector<8x17xf32>
    %c0 = arith.constant 0 : index
    %c0_0 = arith.constant 0 : index
    %1 = vector.load %arg4[%c0, %c0_0] : memref<8x72xf32, #tpu.memory_space<vmem>>, vector<8x72xf32>
    %cst_1 = arith.constant 0.000000e+00 : f32
    %2 = vector.broadcast %cst_1 : f32 to vector<8x256xf32>
    %c0_2 = arith.constant 0 : index
    %c0_3 = arith.constant 0 : index
    %c0_4 = arith.constant 0 : index
    %3 = vector.load %arg3[%c0_2, %c0_3, %c0_4] : memref<3x8x4xf32, #tpu.memory_space<vmem>>, vector<1x8x4xf32>
    %4 = vector.shape_cast %3 : vector<1x8x4xf32> to vector<8x4xf32>
    %c0_5 = arith.constant 0 : index
    %c0_6 = arith.constant 0 : index
    %c0_7 = arith.constant 0 : index
    %c0_8 = arith.constant 0 : index
    %5 = vector.load %arg5[%c0_5, %c0_6, %c0_7, %c0_8] : memref<1x1x4x256xf32, #tpu.memory_space<vmem>>, vector<1x1x4x256xf32>
    %6 = vector.shape_cast %5 : vector<1x1x4x256xf32> to vector<4x256xf32>
    %cst_9 = arith.constant dense<0.000000e+00> : vector<8x256xf32>
    %7 = tpu.matmul %4, %6, %cst_9 {dimension_numbers = #tpu.dot_dimension_numbers<[1], [0], [0], [1], [0, 0, 1, 1], [], []>} : vector<8x4xf32>, vector<4x256xf32>, vector<8x256xf32> -> vector<8x256xf32>
    %8 = arith.addf %2, %7 : vector<8x256xf32>
    %c1 = arith.constant 1 : index
    %c0_10 = arith.constant 0 : index
    %c0_11 = arith.constant 0 : index
    %9 = vector.load %arg3[%c1, %c0_10, %c0_11] : memref<3x8x4xf32, #tpu.memory_space<vmem>>, vector<1x8x4xf32>
    %10 = vector.shape_cast %9 : vector<1x8x4xf32> to vector<8x4xf32>
    %c0_12 = arith.constant 0 : index
    %c0_13 = arith.constant 0 : index
    %c0_14 = arith.constant 0 : index
    %c0_15 = arith.constant 0 : index
    %11 = vector.load %arg6[%c0_12, %c0_13, %c0_14, %c0_15] : memref<1x1x4x256xf32, #tpu.memory_space<vmem>>, vector<1x1x4x256xf32>
    %12 = vector.shape_cast %11 : vector<1x1x4x256xf32> to vector<4x256xf32>
    %cst_16 = arith.constant dense<0.000000e+00> : vector<8x256xf32>
    %13 = tpu.matmul %10, %12, %cst_16 {dimension_numbers = #tpu.dot_dimension_numbers<[1], [0], [0], [1], [0, 0, 1, 1], [], []>} : vector<8x4xf32>, vector<4x256xf32>, vector<8x256xf32> -> vector<8x256xf32>
    %14 = arith.addf %8, %13 : vector<8x256xf32>
    %c2 = arith.constant 2 : index
    %c0_17 = arith.constant 0 : index
    %c0_18 = arith.constant 0 : index
    %15 = vector.load %arg3[%c2, %c0_17, %c0_18] : memref<3x8x4xf32, #tpu.memory_space<vmem>>, vector<1x8x4xf32>
    %16 = vector.shape_cast %15 : vector<1x8x4xf32> to vector<8x4xf32>
    %c0_19 = arith.constant 0 : index
    %c0_20 = arith.constant 0 : index
    %c0_21 = arith.constant 0 : index
    %c0_22 = arith.constant 0 : index
    %17 = vector.load %arg7[%c0_19, %c0_20, %c0_21, %c0_22] : memref<1x1x4x256xf32, #tpu.memory_space<vmem>>, vector<1x1x4x256xf32>
    %18 = vector.shape_cast %17 : vector<1x1x4x256xf32> to vector<4x256xf32>
    %cst_23 = arith.constant dense<0.000000e+00> : vector<8x256xf32>
    %19 = tpu.matmul %16, %18, %cst_23 {dimension_numbers = #tpu.dot_dimension_numbers<[1], [0], [0], [1], [0, 0, 1, 1], [], []>} : vector<8x4xf32>, vector<4x256xf32>, vector<8x256xf32> -> vector<8x256xf32>
    %20 = arith.addf %14, %19 : vector<8x256xf32>
    %21 = tpu.concatenate %0, %20, %0 in 1 : vector<8x17xf32>, vector<8x256xf32>, vector<8x17xf32> -> vector<8x290xf32>
    %22 = vector.extract_strided_slice %21 {offsets = [0, 0], sizes = [8, 256], strides = [1, 1]} : vector<8x290xf32> to vector<8x256xf32>
    %c0_24 = arith.constant 0 : index
    %c0_25 = arith.constant 0 : index
    %c0_26 = arith.constant 0 : index
    %23 = vector.load %arg2[%c0_24, %c0_25, %c0_26] : memref<9x1x256xf32, #tpu.memory_space<vmem>>, vector<1x1x256xf32>
    %24 = vector.shape_cast %23 : vector<1x1x256xf32> to vector<1x256xf32>
    %25 = vector.broadcast %24 : vector<1x256xf32> to vector<8x256xf32>
    %26 = arith.mulf %22, %25 : vector<8x256xf32>
    %27 = vector.extract_strided_slice %21 {offsets = [0, 1], sizes = [8, 256], strides = [1, 1]} : vector<8x290xf32> to vector<8x256xf32>
    %c1_27 = arith.constant 1 : index
    %c0_28 = arith.constant 0 : index
    %c0_29 = arith.constant 0 : index
    %28 = vector.load %arg2[%c1_27, %c0_28, %c0_29] : memref<9x1x256xf32, #tpu.memory_space<vmem>>, vector<1x1x256xf32>
    %29 = vector.shape_cast %28 : vector<1x1x256xf32> to vector<1x256xf32>
    %30 = vector.broadcast %29 : vector<1x256xf32> to vector<8x256xf32>
    %31 = arith.mulf %27, %30 : vector<8x256xf32>
    %32 = vector.extract_strided_slice %21 {offsets = [0, 2], sizes = [8, 256], strides = [1, 1]} : vector<8x290xf32> to vector<8x256xf32>
    %c2_30 = arith.constant 2 : index
    %c0_31 = arith.constant 0 : index
    %c0_32 = arith.constant 0 : index
    %33 = vector.load %arg2[%c2_30, %c0_31, %c0_32] : memref<9x1x256xf32, #tpu.memory_space<vmem>>, vector<1x1x256xf32>
    %34 = vector.shape_cast %33 : vector<1x1x256xf32> to vector<1x256xf32>
    %35 = vector.broadcast %34 : vector<1x256xf32> to vector<8x256xf32>
    %36 = arith.mulf %32, %35 : vector<8x256xf32>
    %37 = vector.extract_strided_slice %21 {offsets = [0, 16], sizes = [8, 256], strides = [1, 1]} : vector<8x290xf32> to vector<8x256xf32>
    %c3 = arith.constant 3 : index
    %c0_33 = arith.constant 0 : index
    %c0_34 = arith.constant 0 : index
    %38 = vector.load %arg2[%c3, %c0_33, %c0_34] : memref<9x1x256xf32, #tpu.memory_space<vmem>>, vector<1x1x256xf32>
    %39 = vector.shape_cast %38 : vector<1x1x256xf32> to vector<1x256xf32>
    %40 = vector.broadcast %39 : vector<1x256xf32> to vector<8x256xf32>
    %41 = arith.mulf %37, %40 : vector<8x256xf32>
    %42 = vector.extract_strided_slice %21 {offsets = [0, 17], sizes = [8, 256], strides = [1, 1]} : vector<8x290xf32> to vector<8x256xf32>
    %c4 = arith.constant 4 : index
    %c0_35 = arith.constant 0 : index
    %c0_36 = arith.constant 0 : index
    %43 = vector.load %arg2[%c4, %c0_35, %c0_36] : memref<9x1x256xf32, #tpu.memory_space<vmem>>, vector<1x1x256xf32>
    %44 = vector.shape_cast %43 : vector<1x1x256xf32> to vector<1x256xf32>
    %45 = vector.broadcast %44 : vector<1x256xf32> to vector<8x256xf32>
    %46 = arith.mulf %42, %45 : vector<8x256xf32>
    %47 = vector.extract_strided_slice %21 {offsets = [0, 18], sizes = [8, 256], strides = [1, 1]} : vector<8x290xf32> to vector<8x256xf32>
    %c5 = arith.constant 5 : index
    %c0_37 = arith.constant 0 : index
    %c0_38 = arith.constant 0 : index
    %48 = vector.load %arg2[%c5, %c0_37, %c0_38] : memref<9x1x256xf32, #tpu.memory_space<vmem>>, vector<1x1x256xf32>
    %49 = vector.shape_cast %48 : vector<1x1x256xf32> to vector<1x256xf32>
    %50 = vector.broadcast %49 : vector<1x256xf32> to vector<8x256xf32>
    %51 = arith.mulf %47, %50 : vector<8x256xf32>
    %52 = vector.extract_strided_slice %21 {offsets = [0, 32], sizes = [8, 256], strides = [1, 1]} : vector<8x290xf32> to vector<8x256xf32>
    %c6 = arith.constant 6 : index
    %c0_39 = arith.constant 0 : index
    %c0_40 = arith.constant 0 : index
    %53 = vector.load %arg2[%c6, %c0_39, %c0_40] : memref<9x1x256xf32, #tpu.memory_space<vmem>>, vector<1x1x256xf32>
    %54 = vector.shape_cast %53 : vector<1x1x256xf32> to vector<1x256xf32>
    %55 = vector.broadcast %54 : vector<1x256xf32> to vector<8x256xf32>
    %56 = arith.mulf %52, %55 : vector<8x256xf32>
    %57 = vector.extract_strided_slice %21 {offsets = [0, 33], sizes = [8, 256], strides = [1, 1]} : vector<8x290xf32> to vector<8x256xf32>
    %c7 = arith.constant 7 : index
    %c0_41 = arith.constant 0 : index
    %c0_42 = arith.constant 0 : index
    %58 = vector.load %arg2[%c7, %c0_41, %c0_42] : memref<9x1x256xf32, #tpu.memory_space<vmem>>, vector<1x1x256xf32>
    %59 = vector.shape_cast %58 : vector<1x1x256xf32> to vector<1x256xf32>
    %60 = vector.broadcast %59 : vector<1x256xf32> to vector<8x256xf32>
    %61 = arith.mulf %57, %60 : vector<8x256xf32>
    %62 = vector.extract_strided_slice %21 {offsets = [0, 34], sizes = [8, 256], strides = [1, 1]} : vector<8x290xf32> to vector<8x256xf32>
    %c8 = arith.constant 8 : index
    %c0_43 = arith.constant 0 : index
    %c0_44 = arith.constant 0 : index
    %63 = vector.load %arg2[%c8, %c0_43, %c0_44] : memref<9x1x256xf32, #tpu.memory_space<vmem>>, vector<1x1x256xf32>
    %64 = vector.shape_cast %63 : vector<1x1x256xf32> to vector<1x256xf32>
    %65 = vector.broadcast %64 : vector<1x256xf32> to vector<8x256xf32>
    %66 = arith.mulf %62, %65 : vector<8x256xf32>
    %67 = tpu.concatenate %26, %31, %36, %41, %46, %51, %56, %61, %66 in 0 : vector<8x256xf32>, vector<8x256xf32>, vector<8x256xf32>, vector<8x256xf32>, vector<8x256xf32>, vector<8x256xf32>, vector<8x256xf32>, vector<8x256xf32>, vector<8x256xf32> -> vector<72x256xf32>
    %cst_45 = arith.constant dense<0.000000e+00> : vector<8x256xf32>
    %68 = tpu.matmul %1, %67, %cst_45 {dimension_numbers = #tpu.dot_dimension_numbers<[1], [0], [0], [1], [0, 0, 1, 1], [], []>} : vector<8x72xf32>, vector<72x256xf32>, vector<8x256xf32> -> vector<8x256xf32>
    %c0_46 = arith.constant 0 : index
    %c0_47 = arith.constant 0 : index
    %c0_48 = arith.constant 0 : index
    %c0_49 = arith.constant 0 : index
    %69 = vector.load %arg11[%c0_46, %c0_47, %c0_48, %c0_49] : memref<1x4x8x256xf32, #tpu.memory_space<vmem>>, vector<1x1x8x256xf32>
    %70 = vector.shape_cast %69 : vector<1x1x8x256xf32> to vector<8x256xf32>
    %71 = vector.shape_cast %68 : vector<8x256xf32> to vector<1x1x8x256xf32>
    tpu.vector_store %arg11[%c0_46, %c0_47, %c0_48, %c0_49], %71 {strides = array<i32>} : memref<1x4x8x256xf32, #tpu.memory_space<vmem>>, vector<1x1x8x256xf32>,
    %cst_50 = arith.constant 0.000000e+00 : f32
    %72 = vector.broadcast %cst_50 : f32 to vector<8x256xf32>
    %c0_51 = arith.constant 0 : index
    %c0_52 = arith.constant 0 : index
    %c0_53 = arith.constant 0 : index
    %73 = vector.load %arg3[%c0_51, %c0_52, %c0_53] : memref<3x8x4xf32, #tpu.memory_space<vmem>>, vector<1x8x4xf32>
    %74 = vector.shape_cast %73 : vector<1x8x4xf32> to vector<8x4xf32>
    %c0_54 = arith.constant 0 : index
    %c0_55 = arith.constant 0 : index
    %c0_56 = arith.constant 0 : index
    %c0_57 = arith.constant 0 : index
    %75 = vector.load %arg6[%c0_54, %c0_55, %c0_56, %c0_57] : memref<1x1x4x256xf32, #tpu.memory_space<vmem>>, vector<1x1x4x256xf32>
    %76 = vector.shape_cast %75 : vector<1x1x4x256xf32> to vector<4x256xf32>
    %cst_58 = arith.constant dense<0.000000e+00> : vector<8x256xf32>
    %77 = tpu.matmul %74, %76, %cst_58 {dimension_numbers = #tpu.dot_dimension_numbers<[1], [0], [0], [1], [0, 0, 1, 1], [], []>} : vector<8x4xf32>, vector<4x256xf32>, vector<8x256xf32> -> vector<8x256xf32>
    %78 = arith.addf %72, %77 : vector<8x256xf32>
    %c1_59 = arith.constant 1 : index
    %c0_60 = arith.constant 0 : index
    %c0_61 = arith.constant 0 : index
    %79 = vector.load %arg3[%c1_59, %c0_60, %c0_61] : memref<3x8x4xf32, #tpu.memory_space<vmem>>, vector<1x8x4xf32>
    %80 = vector.shape_cast %79 : vector<1x8x4xf32> to vector<8x4xf32>
    %c0_62 = arith.constant 0 : index
    %c0_63 = arith.constant 0 : index
    %c0_64 = arith.constant 0 : index
    %c0_65 = arith.constant 0 : index
    %81 = vector.load %arg7[%c0_62, %c0_63, %c0_64, %c0_65] : memref<1x1x4x256xf32, #tpu.memory_space<vmem>>, vector<1x1x4x256xf32>
    %82 = vector.shape_cast %81 : vector<1x1x4x256xf32> to vector<4x256xf32>
    %cst_66 = arith.constant dense<0.000000e+00> : vector<8x256xf32>
    %83 = tpu.matmul %80, %82, %cst_66 {dimension_numbers = #tpu.dot_dimension_numbers<[1], [0], [0], [1], [0, 0, 1, 1], [], []>} : vector<8x4xf32>, vector<4x256xf32>, vector<8x256xf32> -> vector<8x256xf32>
    %84 = arith.addf %78, %83 : vector<8x256xf32>
    %c2_67 = arith.constant 2 : index
    %c0_68 = arith.constant 0 : index
    %c0_69 = arith.constant 0 : index
    %85 = vector.load %arg3[%c2_67, %c0_68, %c0_69] : memref<3x8x4xf32, #tpu.memory_space<vmem>>, vector<1x8x4xf32>
    %86 = vector.shape_cast %85 : vector<1x8x4xf32> to vector<8x4xf32>
    %c0_70 = arith.constant 0 : index
    %c0_71 = arith.constant 0 : index
    %c0_72 = arith.constant 0 : index
    %c0_73 = arith.constant 0 : index
    %87 = vector.load %arg8[%c0_70, %c0_71, %c0_72, %c0_73] : memref<1x1x4x256xf32, #tpu.memory_space<vmem>>, vector<1x1x4x256xf32>
    %88 = vector.shape_cast %87 : vector<1x1x4x256xf32> to vector<4x256xf32>
    %cst_74 = arith.constant dense<0.000000e+00> : vector<8x256xf32>
    %89 = tpu.matmul %86, %88, %cst_74 {dimension_numbers = #tpu.dot_dimension_numbers<[1], [0], [0], [1], [0, 0, 1, 1], [], []>} : vector<8x4xf32>, vector<4x256xf32>, vector<8x256xf32> -> vector<8x256xf32>
    %90 = arith.addf %84, %89 : vector<8x256xf32>
    %91 = tpu.concatenate %0, %90, %0 in 1 : vector<8x17xf32>, vector<8x256xf32>, vector<8x17xf32> -> vector<8x290xf32>
    %92 = vector.extract_strided_slice %91 {offsets = [0, 0], sizes = [8, 256], strides = [1, 1]} : vector<8x290xf32> to vector<8x256xf32>
    %c0_75 = arith.constant 0 : index
    %c0_76 = arith.constant 0 : index
    %c0_77 = arith.constant 0 : index
    %93 = vector.load %arg2[%c0_75, %c0_76, %c0_77] : memref<9x1x256xf32, #tpu.memory_space<vmem>>, vector<1x1x256xf32>
    %94 = vector.shape_cast %93 : vector<1x1x256xf32> to vector<1x256xf32>
    %95 = vector.broadcast %94 : vector<1x256xf32> to vector<8x256xf32>
    %96 = arith.mulf %92, %95 : vector<8x256xf32>
    %97 = vector.extract_strided_slice %91 {offsets = [0, 1], sizes = [8, 256], strides = [1, 1]} : vector<8x290xf32> to vector<8x256xf32>
    %c1_78 = arith.constant 1 : index
    %c0_79 = arith.constant 0 : index
    %c0_80 = arith.constant 0 : index
    %98 = vector.load %arg2[%c1_78, %c0_79, %c0_80] : memref<9x1x256xf32, #tpu.memory_space<vmem>>, vector<1x1x256xf32>
    %99 = vector.shape_cast %98 : vector<1x1x256xf32> to vector<1x256xf32>
    %100 = vector.broadcast %99 : vector<1x256xf32> to vector<8x256xf32>
    %101 = arith.mulf %97, %100 : vector<8x256xf32>
    %102 = vector.extract_strided_slice %91 {offsets = [0, 2], sizes = [8, 256], strides = [1, 1]} : vector<8x290xf32> to vector<8x256xf32>
    %c2_81 = arith.constant 2 : index
    %c0_82 = arith.constant 0 : index
    %c0_83 = arith.constant 0 : index
    %103 = vector.load %arg2[%c2_81, %c0_82, %c0_83] : memref<9x1x256xf32, #tpu.memory_space<vmem>>, vector<1x1x256xf32>
    %104 = vector.shape_cast %103 : vector<1x1x256xf32> to vector<1x256xf32>
    %105 = vector.broadcast %104 : vector<1x256xf32> to vector<8x256xf32>
    %106 = arith.mulf %102, %105 : vector<8x256xf32>
    %107 = vector.extract_strided_slice %91 {offsets = [0, 16], sizes = [8, 256], strides = [1, 1]} : vector<8x290xf32> to vector<8x256xf32>
    %c3_84 = arith.constant 3 : index
    %c0_85 = arith.constant 0 : index
    %c0_86 = arith.constant 0 : index
    %108 = vector.load %arg2[%c3_84, %c0_85, %c0_86] : memref<9x1x256xf32, #tpu.memory_space<vmem>>, vector<1x1x256xf32>
    %109 = vector.shape_cast %108 : vector<1x1x256xf32> to vector<1x256xf32>
    %110 = vector.broadcast %109 : vector<1x256xf32> to vector<8x256xf32>
    %111 = arith.mulf %107, %110 : vector<8x256xf32>
    %112 = vector.extract_strided_slice %91 {offsets = [0, 17], sizes = [8, 256], strides = [1, 1]} : vector<8x290xf32> to vector<8x256xf32>
    %c4_87 = arith.constant 4 : index
    %c0_88 = arith.constant 0 : index
    %c0_89 = arith.constant 0 : index
    %113 = vector.load %arg2[%c4_87, %c0_88, %c0_89] : memref<9x1x256xf32, #tpu.memory_space<vmem>>, vector<1x1x256xf32>
    %114 = vector.shape_cast %113 : vector<1x1x256xf32> to vector<1x256xf32>
    %115 = vector.broadcast %114 : vector<1x256xf32> to vector<8x256xf32>
    %116 = arith.mulf %112, %115 : vector<8x256xf32>
    %117 = vector.extract_strided_slice %91 {offsets = [0, 18], sizes = [8, 256], strides = [1, 1]} : vector<8x290xf32> to vector<8x256xf32>
    %c5_90 = arith.constant 5 : index
    %c0_91 = arith.constant 0 : index
    %c0_92 = arith.constant 0 : index
    %118 = vector.load %arg2[%c5_90, %c0_91, %c0_92] : memref<9x1x256xf32, #tpu.memory_space<vmem>>, vector<1x1x256xf32>
    %119 = vector.shape_cast %118 : vector<1x1x256xf32> to vector<1x256xf32>
    %120 = vector.broadcast %119 : vector<1x256xf32> to vector<8x256xf32>
    %121 = arith.mulf %117, %120 : vector<8x256xf32>
    %122 = vector.extract_strided_slice %91 {offsets = [0, 32], sizes = [8, 256], strides = [1, 1]} : vector<8x290xf32> to vector<8x256xf32>
    %c6_93 = arith.constant 6 : index
    %c0_94 = arith.constant 0 : index
    %c0_95 = arith.constant 0 : index
    %123 = vector.load %arg2[%c6_93, %c0_94, %c0_95] : memref<9x1x256xf32, #tpu.memory_space<vmem>>, vector<1x1x256xf32>
    %124 = vector.shape_cast %123 : vector<1x1x256xf32> to vector<1x256xf32>
    %125 = vector.broadcast %124 : vector<1x256xf32> to vector<8x256xf32>
    %126 = arith.mulf %122, %125 : vector<8x256xf32>
    %127 = vector.extract_strided_slice %91 {offsets = [0, 33], sizes = [8, 256], strides = [1, 1]} : vector<8x290xf32> to vector<8x256xf32>
    %c7_96 = arith.constant 7 : index
    %c0_97 = arith.constant 0 : index
    %c0_98 = arith.constant 0 : index
    %128 = vector.load %arg2[%c7_96, %c0_97, %c0_98] : memref<9x1x256xf32, #tpu.memory_space<vmem>>, vector<1x1x256xf32>
    %129 = vector.shape_cast %128 : vector<1x1x256xf32> to vector<1x256xf32>
    %130 = vector.broadcast %129 : vector<1x256xf32> to vector<8x256xf32>
    %131 = arith.mulf %127, %130 : vector<8x256xf32>
    %132 = vector.extract_strided_slice %91 {offsets = [0, 34], sizes = [8, 256], strides = [1, 1]} : vector<8x290xf32> to vector<8x256xf32>
    %c8_99 = arith.constant 8 : index
    %c0_100 = arith.constant 0 : index
    %c0_101 = arith.constant 0 : index
    %133 = vector.load %arg2[%c8_99, %c0_100, %c0_101] : memref<9x1x256xf32, #tpu.memory_space<vmem>>, vector<1x1x256xf32>
    %134 = vector.shape_cast %133 : vector<1x1x256xf32> to vector<1x256xf32>
    %135 = vector.broadcast %134 : vector<1x256xf32> to vector<8x256xf32>
    %136 = arith.mulf %132, %135 : vector<8x256xf32>
    %137 = tpu.concatenate %96, %101, %106, %111, %116, %121, %126, %131, %136 in 0 : vector<8x256xf32>, vector<8x256xf32>, vector<8x256xf32>, vector<8x256xf32>, vector<8x256xf32>, vector<8x256xf32>, vector<8x256xf32>, vector<8x256xf32>, vector<8x256xf32> -> vector<72x256xf32>
    %cst_102 = arith.constant dense<0.000000e+00> : vector<8x256xf32>
    %138 = tpu.matmul %1, %137, %cst_102 {dimension_numbers = #tpu.dot_dimension_numbers<[1], [0], [0], [1], [0, 0, 1, 1], [], []>} : vector<8x72xf32>, vector<72x256xf32>, vector<8x256xf32> -> vector<8x256xf32>
    %c0_103 = arith.constant 0 : index
    %c1_104 = arith.constant 1 : index
    %c0_105 = arith.constant 0 : index
    %c0_106 = arith.constant 0 : index
    %139 = vector.load %arg11[%c0_103, %c1_104, %c0_105, %c0_106] : memref<1x4x8x256xf32, #tpu.memory_space<vmem>>, vector<1x1x8x256xf32>
    %140 = vector.shape_cast %139 : vector<1x1x8x256xf32> to vector<8x256xf32>
    %141 = vector.shape_cast %138 : vector<8x256xf32> to vector<1x1x8x256xf32>
    tpu.vector_store %arg11[%c0_103, %c1_104, %c0_105, %c0_106], %141 {strides = array<i32>} : memref<1x4x8x256xf32, #tpu.memory_space<vmem>>, vector<1x1x8x256xf32>,
    %cst_107 = arith.constant 0.000000e+00 : f32
    %142 = vector.broadcast %cst_107 : f32 to vector<8x256xf32>
    %c0_108 = arith.constant 0 : index
    %c0_109 = arith.constant 0 : index
    %c0_110 = arith.constant 0 : index
    %143 = vector.load %arg3[%c0_108, %c0_109, %c0_110] : memref<3x8x4xf32, #tpu.memory_space<vmem>>, vector<1x8x4xf32>
    %144 = vector.shape_cast %143 : vector<1x8x4xf32> to vector<8x4xf32>
    %c0_111 = arith.constant 0 : index
    %c0_112 = arith.constant 0 : index
    %c0_113 = arith.constant 0 : index
    %c0_114 = arith.constant 0 : index
    %145 = vector.load %arg7[%c0_111, %c0_112, %c0_113, %c0_114] : memref<1x1x4x256xf32, #tpu.memory_space<vmem>>, vector<1x1x4x256xf32>
    %146 = vector.shape_cast %145 : vector<1x1x4x256xf32> to vector<4x256xf32>
    %cst_115 = arith.constant dense<0.000000e+00> : vector<8x256xf32>
    %147 = tpu.matmul %144, %146, %cst_115 {dimension_numbers = #tpu.dot_dimension_numbers<[1], [0], [0], [1], [0, 0, 1, 1], [], []>} : vector<8x4xf32>, vector<4x256xf32>, vector<8x256xf32> -> vector<8x256xf32>
    %148 = arith.addf %142, %147 : vector<8x256xf32>
    %c1_116 = arith.constant 1 : index
    %c0_117 = arith.constant 0 : index
    %c0_118 = arith.constant 0 : index
    %149 = vector.load %arg3[%c1_116, %c0_117, %c0_118] : memref<3x8x4xf32, #tpu.memory_space<vmem>>, vector<1x8x4xf32>
    %150 = vector.shape_cast %149 : vector<1x8x4xf32> to vector<8x4xf32>
    %c0_119 = arith.constant 0 : index
    %c0_120 = arith.constant 0 : index
    %c0_121 = arith.constant 0 : index
    %c0_122 = arith.constant 0 : index
    %151 = vector.load %arg8[%c0_119, %c0_120, %c0_121, %c0_122] : memref<1x1x4x256xf32, #tpu.memory_space<vmem>>, vector<1x1x4x256xf32>
    %152 = vector.shape_cast %151 : vector<1x1x4x256xf32> to vector<4x256xf32>
    %cst_123 = arith.constant dense<0.000000e+00> : vector<8x256xf32>
    %153 = tpu.matmul %150, %152, %cst_123 {dimension_numbers = #tpu.dot_dimension_numbers<[1], [0], [0], [1], [0, 0, 1, 1], [], []>} : vector<8x4xf32>, vector<4x256xf32>, vector<8x256xf32> -> vector<8x256xf32>
    %154 = arith.addf %148, %153 : vector<8x256xf32>
    %c2_124 = arith.constant 2 : index
    %c0_125 = arith.constant 0 : index
    %c0_126 = arith.constant 0 : index
    %155 = vector.load %arg3[%c2_124, %c0_125, %c0_126] : memref<3x8x4xf32, #tpu.memory_space<vmem>>, vector<1x8x4xf32>
    %156 = vector.shape_cast %155 : vector<1x8x4xf32> to vector<8x4xf32>
    %c0_127 = arith.constant 0 : index
    %c0_128 = arith.constant 0 : index
    %c0_129 = arith.constant 0 : index
    %c0_130 = arith.constant 0 : index
    %157 = vector.load %arg9[%c0_127, %c0_128, %c0_129, %c0_130] : memref<1x1x4x256xf32, #tpu.memory_space<vmem>>, vector<1x1x4x256xf32>
    %158 = vector.shape_cast %157 : vector<1x1x4x256xf32> to vector<4x256xf32>
    %cst_131 = arith.constant dense<0.000000e+00> : vector<8x256xf32>
    %159 = tpu.matmul %156, %158, %cst_131 {dimension_numbers = #tpu.dot_dimension_numbers<[1], [0], [0], [1], [0, 0, 1, 1], [], []>} : vector<8x4xf32>, vector<4x256xf32>, vector<8x256xf32> -> vector<8x256xf32>
    %160 = arith.addf %154, %159 : vector<8x256xf32>
    %161 = tpu.concatenate %0, %160, %0 in 1 : vector<8x17xf32>, vector<8x256xf32>, vector<8x17xf32> -> vector<8x290xf32>
    %162 = vector.extract_strided_slice %161 {offsets = [0, 0], sizes = [8, 256], strides = [1, 1]} : vector<8x290xf32> to vector<8x256xf32>
    %c0_132 = arith.constant 0 : index
    %c0_133 = arith.constant 0 : index
    %c0_134 = arith.constant 0 : index
    %163 = vector.load %arg2[%c0_132, %c0_133, %c0_134] : memref<9x1x256xf32, #tpu.memory_space<vmem>>, vector<1x1x256xf32>
    %164 = vector.shape_cast %163 : vector<1x1x256xf32> to vector<1x256xf32>
    %165 = vector.broadcast %164 : vector<1x256xf32> to vector<8x256xf32>
    %166 = arith.mulf %162, %165 : vector<8x256xf32>
    %167 = vector.extract_strided_slice %161 {offsets = [0, 1], sizes = [8, 256], strides = [1, 1]} : vector<8x290xf32> to vector<8x256xf32>
    %c1_135 = arith.constant 1 : index
    %c0_136 = arith.constant 0 : index
    %c0_137 = arith.constant 0 : index
    %168 = vector.load %arg2[%c1_135, %c0_136, %c0_137] : memref<9x1x256xf32, #tpu.memory_space<vmem>>, vector<1x1x256xf32>
    %169 = vector.shape_cast %168 : vector<1x1x256xf32> to vector<1x256xf32>
    %170 = vector.broadcast %169 : vector<1x256xf32> to vector<8x256xf32>
    %171 = arith.mulf %167, %170 : vector<8x256xf32>
    %172 = vector.extract_strided_slice %161 {offsets = [0, 2], sizes = [8, 256], strides = [1, 1]} : vector<8x290xf32> to vector<8x256xf32>
    %c2_138 = arith.constant 2 : index
    %c0_139 = arith.constant 0 : index
    %c0_140 = arith.constant 0 : index
    %173 = vector.load %arg2[%c2_138, %c0_139, %c0_140] : memref<9x1x256xf32, #tpu.memory_space<vmem>>, vector<1x1x256xf32>
    %174 = vector.shape_cast %173 : vector<1x1x256xf32> to vector<1x256xf32>
    %175 = vector.broadcast %174 : vector<1x256xf32> to vector<8x256xf32>
    %176 = arith.mulf %172, %175 : vector<8x256xf32>
    %177 = vector.extract_strided_slice %161 {offsets = [0, 16], sizes = [8, 256], strides = [1, 1]} : vector<8x290xf32> to vector<8x256xf32>
    %c3_141 = arith.constant 3 : index
    %c0_142 = arith.constant 0 : index
    %c0_143 = arith.constant 0 : index
    %178 = vector.load %arg2[%c3_141, %c0_142, %c0_143] : memref<9x1x256xf32, #tpu.memory_space<vmem>>, vector<1x1x256xf32>
    %179 = vector.shape_cast %178 : vector<1x1x256xf32> to vector<1x256xf32>
    %180 = vector.broadcast %179 : vector<1x256xf32> to vector<8x256xf32>
    %181 = arith.mulf %177, %180 : vector<8x256xf32>
    %182 = vector.extract_strided_slice %161 {offsets = [0, 17], sizes = [8, 256], strides = [1, 1]} : vector<8x290xf32> to vector<8x256xf32>
    %c4_144 = arith.constant 4 : index
    %c0_145 = arith.constant 0 : index
    %c0_146 = arith.constant 0 : index
    %183 = vector.load %arg2[%c4_144, %c0_145, %c0_146] : memref<9x1x256xf32, #tpu.memory_space<vmem>>, vector<1x1x256xf32>
    %184 = vector.shape_cast %183 : vector<1x1x256xf32> to vector<1x256xf32>
    %185 = vector.broadcast %184 : vector<1x256xf32> to vector<8x256xf32>
    %186 = arith.mulf %182, %185 : vector<8x256xf32>
    %187 = vector.extract_strided_slice %161 {offsets = [0, 18], sizes = [8, 256], strides = [1, 1]} : vector<8x290xf32> to vector<8x256xf32>
    %c5_147 = arith.constant 5 : index
    %c0_148 = arith.constant 0 : index
    %c0_149 = arith.constant 0 : index
    %188 = vector.load %arg2[%c5_147, %c0_148, %c0_149] : memref<9x1x256xf32, #tpu.memory_space<vmem>>, vector<1x1x256xf32>
    %189 = vector.shape_cast %188 : vector<1x1x256xf32> to vector<1x256xf32>
    %190 = vector.broadcast %189 : vector<1x256xf32> to vector<8x256xf32>
    %191 = arith.mulf %187, %190 : vector<8x256xf32>
    %192 = vector.extract_strided_slice %161 {offsets = [0, 32], sizes = [8, 256], strides = [1, 1]} : vector<8x290xf32> to vector<8x256xf32>
    %c6_150 = arith.constant 6 : index
    %c0_151 = arith.constant 0 : index
    %c0_152 = arith.constant 0 : index
    %193 = vector.load %arg2[%c6_150, %c0_151, %c0_152] : memref<9x1x256xf32, #tpu.memory_space<vmem>>, vector<1x1x256xf32>
    %194 = vector.shape_cast %193 : vector<1x1x256xf32> to vector<1x256xf32>
    %195 = vector.broadcast %194 : vector<1x256xf32> to vector<8x256xf32>
    %196 = arith.mulf %192, %195 : vector<8x256xf32>
    %197 = vector.extract_strided_slice %161 {offsets = [0, 33], sizes = [8, 256], strides = [1, 1]} : vector<8x290xf32> to vector<8x256xf32>
    %c7_153 = arith.constant 7 : index
    %c0_154 = arith.constant 0 : index
    %c0_155 = arith.constant 0 : index
    %198 = vector.load %arg2[%c7_153, %c0_154, %c0_155] : memref<9x1x256xf32, #tpu.memory_space<vmem>>, vector<1x1x256xf32>
    %199 = vector.shape_cast %198 : vector<1x1x256xf32> to vector<1x256xf32>
    %200 = vector.broadcast %199 : vector<1x256xf32> to vector<8x256xf32>
    %201 = arith.mulf %197, %200 : vector<8x256xf32>
    %202 = vector.extract_strided_slice %161 {offsets = [0, 34], sizes = [8, 256], strides = [1, 1]} : vector<8x290xf32> to vector<8x256xf32>
    %c8_156 = arith.constant 8 : index
    %c0_157 = arith.constant 0 : index
    %c0_158 = arith.constant 0 : index
    %203 = vector.load %arg2[%c8_156, %c0_157, %c0_158] : memref<9x1x256xf32, #tpu.memory_space<vmem>>, vector<1x1x256xf32>
    %204 = vector.shape_cast %203 : vector<1x1x256xf32> to vector<1x256xf32>
    %205 = vector.broadcast %204 : vector<1x256xf32> to vector<8x256xf32>
    %206 = arith.mulf %202, %205 : vector<8x256xf32>
    %207 = tpu.concatenate %166, %171, %176, %181, %186, %191, %196, %201, %206 in 0 : vector<8x256xf32>, vector<8x256xf32>, vector<8x256xf32>, vector<8x256xf32>, vector<8x256xf32>, vector<8x256xf32>, vector<8x256xf32>, vector<8x256xf32>, vector<8x256xf32> -> vector<72x256xf32>
    %cst_159 = arith.constant dense<0.000000e+00> : vector<8x256xf32>
    %208 = tpu.matmul %1, %207, %cst_159 {dimension_numbers = #tpu.dot_dimension_numbers<[1], [0], [0], [1], [0, 0, 1, 1], [], []>} : vector<8x72xf32>, vector<72x256xf32>, vector<8x256xf32> -> vector<8x256xf32>
    %c0_160 = arith.constant 0 : index
    %c2_161 = arith.constant 2 : index
    %c0_162 = arith.constant 0 : index
    %c0_163 = arith.constant 0 : index
    %209 = vector.load %arg11[%c0_160, %c2_161, %c0_162, %c0_163] : memref<1x4x8x256xf32, #tpu.memory_space<vmem>>, vector<1x1x8x256xf32>
    %210 = vector.shape_cast %209 : vector<1x1x8x256xf32> to vector<8x256xf32>
    %211 = vector.shape_cast %208 : vector<8x256xf32> to vector<1x1x8x256xf32>
    tpu.vector_store %arg11[%c0_160, %c2_161, %c0_162, %c0_163], %211 {strides = array<i32>} : memref<1x4x8x256xf32, #tpu.memory_space<vmem>>, vector<1x1x8x256xf32>,
    %cst_164 = arith.constant 0.000000e+00 : f32
    %212 = vector.broadcast %cst_164 : f32 to vector<8x256xf32>
    %c0_165 = arith.constant 0 : index
    %c0_166 = arith.constant 0 : index
    %c0_167 = arith.constant 0 : index
    %213 = vector.load %arg3[%c0_165, %c0_166, %c0_167] : memref<3x8x4xf32, #tpu.memory_space<vmem>>, vector<1x8x4xf32>
    %214 = vector.shape_cast %213 : vector<1x8x4xf32> to vector<8x4xf32>
    %c0_168 = arith.constant 0 : index
    %c0_169 = arith.constant 0 : index
    %c0_170 = arith.constant 0 : index
    %c0_171 = arith.constant 0 : index
    %215 = vector.load %arg8[%c0_168, %c0_169, %c0_170, %c0_171] : memref<1x1x4x256xf32, #tpu.memory_space<vmem>>, vector<1x1x4x256xf32>
    %216 = vector.shape_cast %215 : vector<1x1x4x256xf32> to vector<4x256xf32>
    %cst_172 = arith.constant dense<0.000000e+00> : vector<8x256xf32>
    %217 = tpu.matmul %214, %216, %cst_172 {dimension_numbers = #tpu.dot_dimension_numbers<[1], [0], [0], [1], [0, 0, 1, 1], [], []>} : vector<8x4xf32>, vector<4x256xf32>, vector<8x256xf32> -> vector<8x256xf32>
    %218 = arith.addf %212, %217 : vector<8x256xf32>
    %c1_173 = arith.constant 1 : index
    %c0_174 = arith.constant 0 : index
    %c0_175 = arith.constant 0 : index
    %219 = vector.load %arg3[%c1_173, %c0_174, %c0_175] : memref<3x8x4xf32, #tpu.memory_space<vmem>>, vector<1x8x4xf32>
    %220 = vector.shape_cast %219 : vector<1x8x4xf32> to vector<8x4xf32>
    %c0_176 = arith.constant 0 : index
    %c0_177 = arith.constant 0 : index
    %c0_178 = arith.constant 0 : index
    %c0_179 = arith.constant 0 : index
    %221 = vector.load %arg9[%c0_176, %c0_177, %c0_178, %c0_179] : memref<1x1x4x256xf32, #tpu.memory_space<vmem>>, vector<1x1x4x256xf32>
    %222 = vector.shape_cast %221 : vector<1x1x4x256xf32> to vector<4x256xf32>
    %cst_180 = arith.constant dense<0.000000e+00> : vector<8x256xf32>
    %223 = tpu.matmul %220, %222, %cst_180 {dimension_numbers = #tpu.dot_dimension_numbers<[1], [0], [0], [1], [0, 0, 1, 1], [], []>} : vector<8x4xf32>, vector<4x256xf32>, vector<8x256xf32> -> vector<8x256xf32>
    %224 = arith.addf %218, %223 : vector<8x256xf32>
    %c2_181 = arith.constant 2 : index
    %c0_182 = arith.constant 0 : index
    %c0_183 = arith.constant 0 : index
    %225 = vector.load %arg3[%c2_181, %c0_182, %c0_183] : memref<3x8x4xf32, #tpu.memory_space<vmem>>, vector<1x8x4xf32>
    %226 = vector.shape_cast %225 : vector<1x8x4xf32> to vector<8x4xf32>
    %c0_184 = arith.constant 0 : index
    %c0_185 = arith.constant 0 : index
    %c0_186 = arith.constant 0 : index
    %c0_187 = arith.constant 0 : index
    %227 = vector.load %arg10[%c0_184, %c0_185, %c0_186, %c0_187] : memref<1x1x4x256xf32, #tpu.memory_space<vmem>>, vector<1x1x4x256xf32>
    %228 = vector.shape_cast %227 : vector<1x1x4x256xf32> to vector<4x256xf32>
    %cst_188 = arith.constant dense<0.000000e+00> : vector<8x256xf32>
    %229 = tpu.matmul %226, %228, %cst_188 {dimension_numbers = #tpu.dot_dimension_numbers<[1], [0], [0], [1], [0, 0, 1, 1], [], []>} : vector<8x4xf32>, vector<4x256xf32>, vector<8x256xf32> -> vector<8x256xf32>
    %230 = arith.addf %224, %229 : vector<8x256xf32>
    %231 = tpu.concatenate %0, %230, %0 in 1 : vector<8x17xf32>, vector<8x256xf32>, vector<8x17xf32> -> vector<8x290xf32>
    %232 = vector.extract_strided_slice %231 {offsets = [0, 0], sizes = [8, 256], strides = [1, 1]} : vector<8x290xf32> to vector<8x256xf32>
    %c0_189 = arith.constant 0 : index
    %c0_190 = arith.constant 0 : index
    %c0_191 = arith.constant 0 : index
    %233 = vector.load %arg2[%c0_189, %c0_190, %c0_191] : memref<9x1x256xf32, #tpu.memory_space<vmem>>, vector<1x1x256xf32>
    %234 = vector.shape_cast %233 : vector<1x1x256xf32> to vector<1x256xf32>
    %235 = vector.broadcast %234 : vector<1x256xf32> to vector<8x256xf32>
    %236 = arith.mulf %232, %235 : vector<8x256xf32>
    %237 = vector.extract_strided_slice %231 {offsets = [0, 1], sizes = [8, 256], strides = [1, 1]} : vector<8x290xf32> to vector<8x256xf32>
    %c1_192 = arith.constant 1 : index
    %c0_193 = arith.constant 0 : index
    %c0_194 = arith.constant 0 : index
    %238 = vector.load %arg2[%c1_192, %c0_193, %c0_194] : memref<9x1x256xf32, #tpu.memory_space<vmem>>, vector<1x1x256xf32>
    %239 = vector.shape_cast %238 : vector<1x1x256xf32> to vector<1x256xf32>
    %240 = vector.broadcast %239 : vector<1x256xf32> to vector<8x256xf32>
    %241 = arith.mulf %237, %240 : vector<8x256xf32>
    %242 = vector.extract_strided_slice %231 {offsets = [0, 2], sizes = [8, 256], strides = [1, 1]} : vector<8x290xf32> to vector<8x256xf32>
    %c2_195 = arith.constant 2 : index
    %c0_196 = arith.constant 0 : index
    %c0_197 = arith.constant 0 : index
    %243 = vector.load %arg2[%c2_195, %c0_196, %c0_197] : memref<9x1x256xf32, #tpu.memory_space<vmem>>, vector<1x1x256xf32>
    %244 = vector.shape_cast %243 : vector<1x1x256xf32> to vector<1x256xf32>
    %245 = vector.broadcast %244 : vector<1x256xf32> to vector<8x256xf32>
    %246 = arith.mulf %242, %245 : vector<8x256xf32>
    %247 = vector.extract_strided_slice %231 {offsets = [0, 16], sizes = [8, 256], strides = [1, 1]} : vector<8x290xf32> to vector<8x256xf32>
    %c3_198 = arith.constant 3 : index
    %c0_199 = arith.constant 0 : index
    %c0_200 = arith.constant 0 : index
    %248 = vector.load %arg2[%c3_198, %c0_199, %c0_200] : memref<9x1x256xf32, #tpu.memory_space<vmem>>, vector<1x1x256xf32>
    %249 = vector.shape_cast %248 : vector<1x1x256xf32> to vector<1x256xf32>
    %250 = vector.broadcast %249 : vector<1x256xf32> to vector<8x256xf32>
    %251 = arith.mulf %247, %250 : vector<8x256xf32>
    %252 = vector.extract_strided_slice %231 {offsets = [0, 17], sizes = [8, 256], strides = [1, 1]} : vector<8x290xf32> to vector<8x256xf32>
    %c4_201 = arith.constant 4 : index
    %c0_202 = arith.constant 0 : index
    %c0_203 = arith.constant 0 : index
    %253 = vector.load %arg2[%c4_201, %c0_202, %c0_203] : memref<9x1x256xf32, #tpu.memory_space<vmem>>, vector<1x1x256xf32>
    %254 = vector.shape_cast %253 : vector<1x1x256xf32> to vector<1x256xf32>
    %255 = vector.broadcast %254 : vector<1x256xf32> to vector<8x256xf32>
    %256 = arith.mulf %252, %255 : vector<8x256xf32>
    %257 = vector.extract_strided_slice %231 {offsets = [0, 18], sizes = [8, 256], strides = [1, 1]} : vector<8x290xf32> to vector<8x256xf32>
    %c5_204 = arith.constant 5 : index
    %c0_205 = arith.constant 0 : index
    %c0_206 = arith.constant 0 : index
    %258 = vector.load %arg2[%c5_204, %c0_205, %c0_206] : memref<9x1x256xf32, #tpu.memory_space<vmem>>, vector<1x1x256xf32>
    %259 = vector.shape_cast %258 : vector<1x1x256xf32> to vector<1x256xf32>
    %260 = vector.broadcast %259 : vector<1x256xf32> to vector<8x256xf32>
    %261 = arith.mulf %257, %260 : vector<8x256xf32>
    %262 = vector.extract_strided_slice %231 {offsets = [0, 32], sizes = [8, 256], strides = [1, 1]} : vector<8x290xf32> to vector<8x256xf32>
    %c6_207 = arith.constant 6 : index
    %c0_208 = arith.constant 0 : index
    %c0_209 = arith.constant 0 : index
    %263 = vector.load %arg2[%c6_207, %c0_208, %c0_209] : memref<9x1x256xf32, #tpu.memory_space<vmem>>, vector<1x1x256xf32>
    %264 = vector.shape_cast %263 : vector<1x1x256xf32> to vector<1x256xf32>
    %265 = vector.broadcast %264 : vector<1x256xf32> to vector<8x256xf32>
    %266 = arith.mulf %262, %265 : vector<8x256xf32>
    %267 = vector.extract_strided_slice %231 {offsets = [0, 33], sizes = [8, 256], strides = [1, 1]} : vector<8x290xf32> to vector<8x256xf32>
    %c7_210 = arith.constant 7 : index
    %c0_211 = arith.constant 0 : index
    %c0_212 = arith.constant 0 : index
    %268 = vector.load %arg2[%c7_210, %c0_211, %c0_212] : memref<9x1x256xf32, #tpu.memory_space<vmem>>, vector<1x1x256xf32>
    %269 = vector.shape_cast %268 : vector<1x1x256xf32> to vector<1x256xf32>
    %270 = vector.broadcast %269 : vector<1x256xf32> to vector<8x256xf32>
    %271 = arith.mulf %267, %270 : vector<8x256xf32>
    %272 = vector.extract_strided_slice %231 {offsets = [0, 34], sizes = [8, 256], strides = [1, 1]} : vector<8x290xf32> to vector<8x256xf32>
    %c8_213 = arith.constant 8 : index
    %c0_214 = arith.constant 0 : index
    %c0_215 = arith.constant 0 : index
    %273 = vector.load %arg2[%c8_213, %c0_214, %c0_215] : memref<9x1x256xf32, #tpu.memory_space<vmem>>, vector<1x1x256xf32>
    %274 = vector.shape_cast %273 : vector<1x1x256xf32> to vector<1x256xf32>
    %275 = vector.broadcast %274 : vector<1x256xf32> to vector<8x256xf32>
    %276 = arith.mulf %272, %275 : vector<8x256xf32>
    %277 = tpu.concatenate %236, %241, %246, %251, %256, %261, %266, %271, %276 in 0 : vector<8x256xf32>, vector<8x256xf32>, vector<8x256xf32>, vector<8x256xf32>, vector<8x256xf32>, vector<8x256xf32>, vector<8x256xf32>, vector<8x256xf32>, vector<8x256xf32> -> vector<72x256xf32>
    %cst_216 = arith.constant dense<0.000000e+00> : vector<8x256xf32>
    %278 = tpu.matmul %1, %277, %cst_216 {dimension_numbers = #tpu.dot_dimension_numbers<[1], [0], [0], [1], [0, 0, 1, 1], [], []>} : vector<8x72xf32>, vector<72x256xf32>, vector<8x256xf32> -> vector<8x256xf32>
    %c0_217 = arith.constant 0 : index
    %c3_218 = arith.constant 3 : index
    %c0_219 = arith.constant 0 : index
    %c0_220 = arith.constant 0 : index
    %279 = vector.load %arg11[%c0_217, %c3_218, %c0_219, %c0_220] : memref<1x4x8x256xf32, #tpu.memory_space<vmem>>, vector<1x1x8x256xf32>
    %280 = vector.shape_cast %279 : vector<1x1x8x256xf32> to vector<8x256xf32>
    %281 = vector.shape_cast %278 : vector<8x256xf32> to vector<1x1x8x256xf32>
    tpu.vector_store %arg11[%c0_217, %c3_218, %c0_219, %c0_220], %281 {strides = array<i32>} : memref<1x4x8x256xf32, #tpu.memory_space<vmem>>, vector<1x1x8x256xf32>,
    return
  }
  func.func @transform_0(%arg0: i32, %arg1: i32) -> (i32, i32, i32) {
    %c0_i32 = arith.constant 0 : i32
    %c0_i32_0 = arith.constant 0 : i32
    %c0_i32_1 = arith.constant 0 : i32
    %c0_i32_2 = arith.constant 0 : i32
    return %c0_i32, %c0_i32_0, %c0_i32_1 : i32, i32, i32
  }
  func.func @transform_1(%arg0: i32, %arg1: i32) -> (i32, i32, i32) {
    %c0_i32 = arith.constant 0 : i32
    %c0_i32_0 = arith.constant 0 : i32
    %c0_i32_1 = arith.constant 0 : i32
    %c0_i32_2 = arith.constant 0 : i32
    return %c0_i32, %c0_i32_0, %c0_i32_1 : i32, i32, i32
  }
  func.func @transform_2(%arg0: i32, %arg1: i32) -> (i32, i32) {
    %c0_i32 = arith.constant 0 : i32
    %c0_i32_0 = arith.constant 0 : i32
    %c0_i32_1 = arith.constant 0 : i32
    return %c0_i32, %c0_i32_0 : i32, i32
  }
  func.func @transform_3(%arg0: i32, %arg1: i32) -> (i32, i32, i32, i32) {
    %c4_i32 = arith.constant 4 : i32
    %0 = arith.muli %arg1, %c4_i32 : i32
    %c0_i32 = arith.constant 0 : i32
    %1 = arith.addi %0, %c0_i32 : i32
    %c0_i32_0 = arith.constant 0 : i32
    %c0_i32_1 = arith.constant 0 : i32
    %c0_i32_2 = arith.constant 0 : i32
    return %arg0, %1, %c0_i32_0, %c0_i32_1 : i32, i32, i32, i32
  }
  func.func @transform_4(%arg0: i32, %arg1: i32) -> (i32, i32, i32, i32) {
    %c4_i32 = arith.constant 4 : i32
    %0 = arith.muli %arg1, %c4_i32 : i32
    %c1_i32 = arith.constant 1 : i32
    %1 = arith.addi %0, %c1_i32 : i32
    %c0_i32 = arith.constant 0 : i32
    %c0_i32_0 = arith.constant 0 : i32
    %c0_i32_1 = arith.constant 0 : i32
    return %arg0, %1, %c0_i32, %c0_i32_0 : i32, i32, i32, i32
  }
  func.func @transform_5(%arg0: i32, %arg1: i32) -> (i32, i32, i32, i32) {
    %c4_i32 = arith.constant 4 : i32
    %0 = arith.muli %arg1, %c4_i32 : i32
    %c2_i32 = arith.constant 2 : i32
    %1 = arith.addi %0, %c2_i32 : i32
    %c0_i32 = arith.constant 0 : i32
    %c0_i32_0 = arith.constant 0 : i32
    %c0_i32_1 = arith.constant 0 : i32
    return %arg0, %1, %c0_i32, %c0_i32_0 : i32, i32, i32, i32
  }
  func.func @transform_6(%arg0: i32, %arg1: i32) -> (i32, i32, i32, i32) {
    %c4_i32 = arith.constant 4 : i32
    %0 = arith.muli %arg1, %c4_i32 : i32
    %c3_i32 = arith.constant 3 : i32
    %1 = arith.addi %0, %c3_i32 : i32
    %c0_i32 = arith.constant 0 : i32
    %c0_i32_0 = arith.constant 0 : i32
    %c0_i32_1 = arith.constant 0 : i32
    return %arg0, %1, %c0_i32, %c0_i32_0 : i32, i32, i32, i32
  }
  func.func @transform_7(%arg0: i32, %arg1: i32) -> (i32, i32, i32, i32) {
    %c4_i32 = arith.constant 4 : i32
    %0 = arith.muli %arg1, %c4_i32 : i32
    %c4_i32_0 = arith.constant 4 : i32
    %1 = arith.addi %0, %c4_i32_0 : i32
    %c0_i32 = arith.constant 0 : i32
    %c0_i32_1 = arith.constant 0 : i32
    %c0_i32_2 = arith.constant 0 : i32
    return %arg0, %1, %c0_i32, %c0_i32_1 : i32, i32, i32, i32
  }
  func.func @transform_8(%arg0: i32, %arg1: i32) -> (i32, i32, i32, i32) {
    %c4_i32 = arith.constant 4 : i32
    %0 = arith.muli %arg1, %c4_i32 : i32
    %c5_i32 = arith.constant 5 : i32
    %1 = arith.addi %0, %c5_i32 : i32
    %c0_i32 = arith.constant 0 : i32
    %c0_i32_0 = arith.constant 0 : i32
    %c0_i32_1 = arith.constant 0 : i32
    return %arg0, %1, %c0_i32, %c0_i32_0 : i32, i32, i32, i32
  }
  func.func @transform_9(%arg0: i32, %arg1: i32) -> (i32, i32, i32, i32) {
    %c0_i32 = arith.constant 0 : i32
    %c0_i32_0 = arith.constant 0 : i32
    %c0_i32_1 = arith.constant 0 : i32
    return %arg0, %arg1, %c0_i32, %c0_i32_0 : i32, i32, i32, i32
  }
}

</mosaic_0001>

<llo_original>
// kernel: sepconv_pd_forward.1
$region0: #{sepconv_pd_forward.1}
  #allocation0 [shape = 'u32[]', space=smem, size = 0x4, offset = 0x4, fixed_abs, tag = 'smem constant byte address 0x4 - core index']
  #allocation1 [shape = 'u32[72,128]{1,0:T(1,128)}', space=vmem, size = 0x9000, scoped, tag = 'internal scratch']
  %s0 = inlined_call_operand.vmem [shape: f32[9,1,256], index: 0, kind: input, shape index: {}]
  %s1 = inlined_call_operand.vmem [shape: f32[3,8,4], index: 1, kind: input, shape index: {}]
  %s2 = inlined_call_operand.vmem [shape: f32[8,72], index: 2, kind: input, shape index: {}]
  %s3 = inlined_call_operand.vmem [shape: f32[2,10,4,256], index: 3, kind: input, shape index: {}, may-alias: {3,4,5,6,7,8}]
  %s4 = inlined_call_operand.vmem [shape: f32[2,10,4,256], index: 4, kind: input, shape index: {}, may-alias: {3,4,5,6,7,8}]
  %s5 = inlined_call_operand.vmem [shape: f32[2,10,4,256], index: 5, kind: input, shape index: {}, may-alias: {3,4,5,6,7,8}]
  %s6 = inlined_call_operand.vmem [shape: f32[2,10,4,256], index: 6, kind: input, shape index: {}, may-alias: {3,4,5,6,7,8}]
  %s7 = inlined_call_operand.vmem [shape: f32[2,10,4,256], index: 7, kind: input, shape index: {}, may-alias: {3,4,5,6,7,8}]
  %s8 = inlined_call_operand.vmem [shape: f32[2,10,4,256], index: 8, kind: input, shape index: {}, may-alias: {3,4,5,6,7,8}]
  %s9 = inlined_call_operand.vmem [shape: f32[2,8,8,256], index: 9, kind: output, shape index: {}]
  %s10 = sld [smem:[#allocation0]]
  $region69: #{sepconv_pd_forward.1} parent=0
    _
  %s12 = ssub.s32 1, %s10
  %s13 = scalar_select 0, %s12, %s10
  loop: start=0, step=1, limit=6
  $region2: #{sepconv_pd_forward.1} parent=0 // loop_pre_header
    _
  $region3: #{sepconv_pd_forward.1} parent=0 // loop_header
    %s15 = sphi 0, %s19
    %p16 = scmp.ge.s32.totalorder %s15, 6
    %s22 = sphi 0, %s34
    %s23 = sphi 0, %s30
    %s24 = sphi 0, %s22
    %s25 = sphi 0, %s23
    %s26 = sphi 0, %s24
    %s27 = sphi 0, %s25
    %s35 = sphi 0, %s35
    %s37 = sphi 0, %s35
    %s38 = sphi 0, %s37
    %s52 = sphi 0, %s38
    %s56 = sphi 0, %s56
    %s58 = sphi 0, %s56
    %s59 = sphi 0, %s58
    %s73 = sphi 0, %s59
    %s77 = sphi 0, %s77
    %s79 = sphi 0, %s77
    %s80 = sphi 0, %s79
    %s94 = sphi 0, %s80
    %s104 = sphi 0, %s106
    %s107 = sphi 0, %s104
    %s108 = sphi 0, %s107
    %s124 = sphi 0, %s108
    %s136 = sphi 0, %s138
    %s139 = sphi 0, %s136
    %s140 = sphi 0, %s139
    %s156 = sphi 0, %s140
    %s168 = sphi 0, %s170
    %s171 = sphi 0, %s168
    %s172 = sphi 0, %s171
    %s188 = sphi 0, %s172
    %s200 = sphi 0, %s202
    %s203 = sphi 0, %s200
    %s204 = sphi 0, %s203
    %s220 = sphi 0, %s204
    %s232 = sphi 0, %s234
    %s235 = sphi 0, %s232
    %s236 = sphi 0, %s235
    %s252 = sphi 0, %s236
    %s264 = sphi 0, %s266
    %s267 = sphi 0, %s264
    %s268 = sphi 0, %s267
    %s284 = sphi 0, %s268
    %s292 = sphi 0, %s294
    %s295 = sphi 0, %s292
    %s296 = sphi 0, %s295
    %s312 = sphi 0, %s296
  $region4: #{sepconv_pd_forward.1} parent=0 // loop_header_branch
    %18 = sbr.rel (%p16) target = $region8
  $region5: #{sepconv_pd_forward.1} parent=0 // loop_body
    %s20 = ssub.s32 %s15, 1
    %s21 = ssub.s32 %s15, 2
    %s28 = sadd.s32 1, %s23
    %p29 = scmp.ge.s32.totalorder %s28, 2
    %s30 = scalar_select %p29, 0, %s28
    %s31 = sadd.s32 1, %s22
    %s32 = scalar_select %p29, %s31, %s22
    %p33 = scmp.ge.s32.totalorder %s32, 2
    %s34 = scalar_select %p33, 0, %s32
    %s36 = sadd.s32 %s35, 1
    %p39 = scmp.eq.s32.totalorder %s15, 3
    %p40 = scmp.ne.s32.totalorder %s35, %s37
    %p41 = scmp.eq.s32.totalorder %s15, 0
    %p42 = por %p40, %p41
    %p43 = scmp.ne.s32.totalorder %s35, %s37
    %p44 = scmp.eq.s32.totalorder %s20, 3
    %p45 = por %p43, %p44
    %p46 = scmp.ne.s32.totalorder %s37, %s38
    %p47 = scmp.eq.s32.totalorder %s20, 0
    %p48 = por %p46, %p47
    %p49 = scmp.ne.s32.totalorder %s37, %s38
    %p50 = scmp.eq.s32.totalorder %s21, 3
    %p51 = por %p49, %p50
    %p53 = scmp.ne.s32.totalorder %s38, %s52
    %p54 = scmp.eq.s32.totalorder %s21, 0
    %p55 = por %p53, %p54
    %s57 = sadd.s32 %s56, 1
    %p60 = scmp.eq.s32.totalorder %s15, 3
    %p61 = scmp.ne.s32.totalorder %s56, %s58
    %p62 = scmp.eq.s32.totalorder %s15, 0
    %p63 = por %p61, %p62
    %p64 = scmp.ne.s32.totalorder %s56, %s58
    %p65 = scmp.eq.s32.totalorder %s20, 3
    %p66 = por %p64, %p65
    %p67 = scmp.ne.s32.totalorder %s58, %s59
    %p68 = scmp.eq.s32.totalorder %s20, 0
    %p69 = por %p67, %p68
    %p70 = scmp.ne.s32.totalorder %s58, %s59
    %p71 = scmp.eq.s32.totalorder %s21, 3
    %p72 = por %p70, %p71
    %p74 = scmp.ne.s32.totalorder %s59, %s73
    %p75 = scmp.eq.s32.totalorder %s21, 0
    %p76 = por %p74, %p75
    %s78 = sadd.s32 %s77, 1
    %p81 = scmp.eq.s32.totalorder %s15, 3
    %p82 = scmp.ne.s32.totalorder %s77, %s79
    %p83 = scmp.eq.s32.totalorder %s15, 0
    %p84 = por %p82, %p83
    %p85 = scmp.ne.s32.totalorder %s77, %s79
    %p86 = scmp.eq.s32.totalorder %s20, 3
    %p87 = por %p85, %p86
    %p88 = scmp.ne.s32.totalorder %s79, %s80
    %p89 = scmp.eq.s32.totalorder %s20, 0
    %p90 = por %p88, %p89
    %p91 = scmp.ne.s32.totalorder %s79, %s80
    %p92 = scmp.eq.s32.totalorder %s21, 3
    %p93 = por %p91, %p92
    %p95 = scmp.ne.s32.totalorder %s80, %s94
    %p96 = scmp.eq.s32.totalorder %s21, 0
    %p97 = por %p95, %p96
    %s98 = smul.u32 %s23, 4
    %s99 = smul.u32 %s30, 4
    %s100 = ssub.s32 %s22, %s34
    %s101 = ssub.s32 %s98, %s99
    %s102 = sor.u32 %s100, %s101
    %p103 = scmp.eq.s32.totalorder %s102, 0
    %s105 = sadd.s32 %s104, 1
    %s106 = scalar_select %p103, %s104, %s105
    %p109 = pneg %p103
    %p110 = scmp.eq.s32.totalorder %s15, 3
    %p111 = por %p109, %p110
    %p112 = scmp.ne.s32.totalorder %s104, %s107
    %p113 = scmp.eq.s32.totalorder %s15, 0
    %p114 = por %p112, %p113
    %p115 = scmp.ne.s32.totalorder %s104, %s107
    %p116 = scmp.eq.s32.totalorder %s20, 3
    %p117 = por %p115, %p116
    %p118 = scmp.ne.s32.totalorder %s107, %s108
    %p119 = scmp.eq.s32.totalorder %s20, 0
    %p120 = por %p118, %p119
    %p121 = scmp.ne.s32.totalorder %s107, %s108
    %p122 = scmp.eq.s32.totalorder %s21, 3
    %p123 = por %p121, %p122
    %p125 = scmp.ne.s32.totalorder %s108, %s124
    %p126 = scmp.eq.s32.totalorder %s21, 0
    %p127 = por %p125, %p126
    %s128 = smul.u32 %s23, 4
    %s129 = sadd.s32 %s128, 1
    %s130 = smul.u32 %s30, 4
    %s131 = sadd.s32 %s130, 1
    %s132 = ssub.s32 %s22, %s34
    %s133 = ssub.s32 %s129, %s131
    %s134 = sor.u32 %s132, %s133
    %p135 = scmp.eq.s32.totalorder %s134, 0
    %s137 = sadd.s32 %s136, 1
    %s138 = scalar_select %p135, %s136, %s137
    %p141 = pneg %p135
    %p142 = scmp.eq.s32.totalorder %s15, 3
    %p143 = por %p141, %p142
    %p144 = scmp.ne.s32.totalorder %s136, %s139
    %p145 = scmp.eq.s32.totalorder %s15, 0
    %p146 = por %p144, %p145
    %p147 = scmp.ne.s32.totalorder %s136, %s139
    %p148 = scmp.eq.s32.totalorder %s20, 3
    %p149 = por %p147, %p148
    %p150 = scmp.ne.s32.totalorder %s139, %s140
    %p151 = scmp.eq.s32.totalorder %s20, 0
    %p152 = por %p150, %p151
    %p153 = scmp.ne.s32.totalorder %s139, %s140
    %p154 = scmp.eq.s32.totalorder %s21, 3
    %p155 = por %p153, %p154
    %p157 = scmp.ne.s32.totalorder %s140, %s156
    %p158 = scmp.eq.s32.totalorder %s21, 0
    %p159 = por %p157, %p158
    %s160 = smul.u32 %s23, 4
    %s161 = sadd.s32 %s160, 2
    %s162 = smul.u32 %s30, 4
    %s163 = sadd.s32 %s162, 2
    %s164 = ssub.s32 %s22, %s34
    %s165 = ssub.s32 %s161, %s163
    %s166 = sor.u32 %s164, %s165
    %p167 = scmp.eq.s32.totalorder %s166, 0
    %s169 = sadd.s32 %s168, 1
    %s170 = scalar_select %p167, %s168, %s169
    %p173 = pneg %p167
    %p174 = scmp.eq.s32.totalorder %s15, 3
    %p175 = por %p173, %p174
    %p176 = scmp.ne.s32.totalorder %s168, %s171
    %p177 = scmp.eq.s32.totalorder %s15, 0
    %p178 = por %p176, %p177
    %p179 = scmp.ne.s32.totalorder %s168, %s171
    %p180 = scmp.eq.s32.totalorder %s20, 3
    %p181 = por %p179, %p180
    %p182 = scmp.ne.s32.totalorder %s171, %s172
    %p183 = scmp.eq.s32.totalorder %s20, 0
    %p184 = por %p182, %p183
    %p185 = scmp.ne.s32.totalorder %s171, %s172
    %p186 = scmp.eq.s32.totalorder %s21, 3
    %p187 = por %p185, %p186
    %p189 = scmp.ne.s32.totalorder %s172, %s188
    %p190 = scmp.eq.s32.totalorder %s21, 0
    %p191 = por %p189, %p190
    %s192 = smul.u32 %s23, 4
    %s193 = sadd.s32 %s192, 3
    %s194 = smul.u32 %s30, 4
    %s195 = sadd.s32 %s194, 3
    %s196 = ssub.s32 %s22, %s34
    %s197 = ssub.s32 %s193, %s195
    %s198 = sor.u32 %s196, %s197
    %p199 = scmp.eq.s32.totalorder %s198, 0
    %s201 = sadd.s32 %s200, 1
    %s202 = scalar_select %p199, %s200, %s201
    %p205 = pneg %p199
    %p206 = scmp.eq.s32.totalorder %s15, 3
    %p207 = por %p205, %p206
    %p208 = scmp.ne.s32.totalorder %s200, %s203
    %p209 = scmp.eq.s32.totalorder %s15, 0
    %p210 = por %p208, %p209
    %p211 = scmp.ne.s32.totalorder %s200, %s203
    %p212 = scmp.eq.s32.totalorder %s20, 3
    %p213 = por %p211, %p212
    %p214 = scmp.ne.s32.totalorder %s203, %s204
    %p215 = scmp.eq.s32.totalorder %s20, 0
    %p216 = por %p214, %p215
    %p217 = scmp.ne.s32.totalorder %s203, %s204
    %p218 = scmp.eq.s32.totalorder %s21, 3
    %p219 = por %p217, %p218
    %p221 = scmp.ne.s32.totalorder %s204, %s220
    %p222 = scmp.eq.s32.totalorder %s21, 0
    %p223 = por %p221, %p222
    %s224 = smul.u32 %s23, 4
    %s225 = sadd.s32 %s224, 4
    %s226 = smul.u32 %s30, 4
    %s227 = sadd.s32 %s226, 4
    %s228 = ssub.s32 %s22, %s34
    %s229 = ssub.s32 %s225, %s227
    %s230 = sor.u32 %s228, %s229
    %p231 = scmp.eq.s32.totalorder %s230, 0
    %s233 = sadd.s32 %s232, 1
    %s234 = scalar_select %p231, %s232, %s233
    %p237 = pneg %p231
    %p238 = scmp.eq.s32.totalorder %s15, 3
    %p239 = por %p237, %p238
    %p240 = scmp.ne.s32.totalorder %s232, %s235
    %p241 = scmp.eq.s32.totalorder %s15, 0
    %p242 = por %p240, %p241
    %p243 = scmp.ne.s32.totalorder %s232, %s235
    %p244 = scmp.eq.s32.totalorder %s20, 3
    %p245 = por %p243, %p244
    %p246 = scmp.ne.s32.totalorder %s235, %s236
    %p247 = scmp.eq.s32.totalorder %s20, 0
    %p248 = por %p246, %p247
    %p249 = scmp.ne.s32.totalorder %s235, %s236
    %p250 = scmp.eq.s32.totalorder %s21, 3
    %p251 = por %p249, %p250
    %p253 = scmp.ne.s32.totalorder %s236, %s252
    %p254 = scmp.eq.s32.totalorder %s21, 0
    %p255 = por %p253, %p254
    %s256 = smul.u32 %s23, 4
    %s257 = sadd.s32 %s256, 5
    %s258 = smul.u32 %s30, 4
    %s259 = sadd.s32 %s258, 5
    %s260 = ssub.s32 %s22, %s34
    %s261 = ssub.s32 %s257, %s259
    %s262 = sor.u32 %s260, %s261
    %p263 = scmp.eq.s32.totalorder %s262, 0
    %s265 = sadd.s32 %s264, 1
    %s266 = scalar_select %p263, %s264, %s265
    %p269 = pneg %p263
    %p270 = scmp.eq.s32.totalorder %s15, 3
    %p271 = por %p269, %p270
    %p272 = scmp.ne.s32.totalorder %s264, %s267
    %p273 = scmp.eq.s32.totalorder %s15, 0
    %p274 = por %p272, %p273
    %p275 = scmp.ne.s32.totalorder %s264, %s267
    %p276 = scmp.eq.s32.totalorder %s20, 3
    %p277 = por %p275, %p276
    %p278 = scmp.ne.s32.totalorder %s267, %s268
    %p279 = scmp.eq.s32.totalorder %s20, 0
    %p280 = por %p278, %p279
    %p281 = scmp.ne.s32.totalorder %s267, %s268
    %p282 = scmp.eq.s32.totalorder %s21, 3
    %p283 = por %p281, %p282
    %p285 = scmp.ne.s32.totalorder %s268, %s284
    %p286 = scmp.eq.s32.totalorder %s21, 0
    %p287 = por %p285, %p286
    %s288 = ssub.s32 %s22, %s34
    %s289 = ssub.s32 %s23, %s30
    %s290 = sor.u32 %s288, %s289
    %p291 = scmp.eq.s32.totalorder %s290, 0
    %s293 = sadd.s32 %s292, 1
    %s294 = scalar_select %p291, %s292, %s293
    %p297 = pneg %p291
    %p298 = scmp.eq.s32.totalorder %s15, 3
    %p299 = por %p297, %p298
    %p300 = scmp.ne.s32.totalorder %s292, %s295
    %p301 = scmp.eq.s32.totalorder %s15, 0
    %p302 = por %p300, %p301
    %p303 = scmp.ne.s32.totalorder %s292, %s295
    %p304 = scmp.eq.s32.totalorder %s20, 3
    %p305 = por %p303, %p304
    %p306 = scmp.ne.s32.totalorder %s295, %s296
    %p307 = scmp.eq.s32.totalorder %s20, 0
    %p308 = por %p306, %p307
    %p309 = scmp.ne.s32.totalorder %s295, %s296
    %p310 = scmp.eq.s32.totalorder %s21, 3
    %p311 = por %p309, %p310
    %p313 = scmp.ne.s32.totalorder %s296, %s312
    %p314 = scmp.eq.s32.totalorder %s21, 0
    %p315 = por %p313, %p314
    %p316 = scmp.le.s32.totalorder 1, %s15
    %p317 = scmp.lt.s32.totalorder %s15, 5
    %p318 = pnand %p316, %p317
    %p319 = pneg %p318
    // Predicated region
    $region9: #{sepconv_pd_forward.1} parent=5 // pred_check
      _
    $region10: #{sepconv_pd_forward.1} parent=5 // pred_check_branch
      %321 = sbr.rel (%p318) target = $region12
    $region11: #{sepconv_pd_forward.1} parent=5 // pred_region
      %s322 = ssub.s32 %s15, 1
      // Predicated region
      $region13: #{sepconv_pd_forward.1} parent=11 // pred_check
        %p323 = pneg %p48
      $region14: #{sepconv_pd_forward.1} parent=11 // pred_check_branch
        %325 = sbr.rel (%p323) target = $region16
      $region15: #{sepconv_pd_forward.1} parent=11 // pred_region
        _
      $region16: #{sepconv_pd_forward.1} parent=11 // pred_fallthru
        _
      // Predicated region
      $region17: #{sepconv_pd_forward.1} parent=11 // pred_check
        %p326 = pneg %p69
      $region18: #{sepconv_pd_forward.1} parent=11 // pred_check_branch
        %328 = sbr.rel (%p326) target = $region20
      $region19: #{sepconv_pd_forward.1} parent=11 // pred_region
        _
      $region20: #{sepconv_pd_forward.1} parent=11 // pred_fallthru
        _
      // Predicated region
      $region21: #{sepconv_pd_forward.1} parent=11 // pred_check
        %p329 = pneg %p90
      $region22: #{sepconv_pd_forward.1} parent=11 // pred_check_branch
        %331 = sbr.rel (%p329) target = $region24
      $region23: #{sepconv_pd_forward.1} parent=11 // pred_region
        _
      $region24: #{sepconv_pd_forward.1} parent=11 // pred_fallthru
        _
    $region12: #{sepconv_pd_forward.1} parent=5 // pred_fallthru
      _
    %p332 = scmp.lt.s32.totalorder %s15, 4
    // Predicated region
    $region25: #{sepconv_pd_forward.1} parent=5 // pred_check
      %p333 = pneg %p332
    $region26: #{sepconv_pd_forward.1} parent=5 // pred_check_branch
      %335 = sbr.rel (%p333) target = $region28
    $region27: #{sepconv_pd_forward.1} parent=5 // pred_region
      // Predicated region
      $region29: #{sepconv_pd_forward.1} parent=27 // pred_check
        %p336 = pneg %p114
      $region30: #{sepconv_pd_forward.1} parent=27 // pred_check_branch
        %338 = sbr.rel (%p336) target = $region32
      $region31: #{sepconv_pd_forward.1} parent=27 // pred_region
        %s339 = smul.u32 %s23, 4
        %p340 = scmp.lt.s32.totalorder %s22, 1
        %s341 = scalar_select %p340, %s22, 1
        %p342 = scmp.lt.s32.totalorder %s339, 9
        %s343 = scalar_select %p342, %s339, 9
        %s344 = smul.addr %s343, 2
        %s345 = smul.addr %s341, 20
        %s346 = sadd.s32 %s344, %s345
        %s347 = smul.addr %s346, 4
        %s348 = scalar_lea.vmem %s3, %s347
        %s349 = smul.u32 %s23, 4
      $region32: #{sepconv_pd_forward.1} parent=27 // pred_fallthru
        _
      // Predicated region
      $region33: #{sepconv_pd_forward.1} parent=27 // pred_check
        %p350 = pneg %p146
      $region34: #{sepconv_pd_forward.1} parent=27 // pred_check_branch
        %352 = sbr.rel (%p350) target = $region36
      $region35: #{sepconv_pd_forward.1} parent=27 // pred_region
        %s353 = smul.u32 %s23, 4
        %s354 = sadd.s32 %s353, 1
        %p355 = scmp.lt.s32.totalorder %s22, 1
        %s356 = scalar_select %p355, %s22, 1
        %p357 = scmp.lt.s32.totalorder %s354, 9
        %s358 = scalar_select %p357, %s354, 9
        %s359 = smul.addr %s358, 2
        %s360 = smul.addr %s356, 20
        %s361 = sadd.s32 %s359, %s360
        %s362 = smul.addr %s361, 4
        %s363 = scalar_lea.vmem %s4, %s362
        %s364 = smul.u32 %s23, 4
        %s365 = sadd.s32 %s364, 1
      $region36: #{sepconv_pd_forward.1} parent=27 // pred_fallthru
        _
      // Predicated region
      $region37: #{sepconv_pd_forward.1} parent=27 // pred_check
        %p366 = pneg %p178
      $region38: #{sepconv_pd_forward.1} parent=27 // pred_check_branch
        %368 = sbr.rel (%p366) target = $region40
      $region39: #{sepconv_pd_forward.1} parent=27 // pred_region
        %s369 = smul.u32 %s23, 4
        %s370 = sadd.s32 %s369, 2
        %p371 = scmp.lt.s32.totalorder %s22, 1
        %s372 = scalar_select %p371, %s22, 1
        %p373 = scmp.lt.s32.totalorder %s370, 9
        %s374 = scalar_select %p373, %s370, 9
        %s375 = smul.addr %s374, 2
        %s376 = smul.addr %s372, 20
        %s377 = sadd.s32 %s375, %s376
        %s378 = smul.addr %s377, 4
        %s379 = scalar_lea.vmem %s5, %s378
        %s380 = smul.u32 %s23, 4
        %s381 = sadd.s32 %s380, 2
      $region40: #{sepconv_pd_forward.1} parent=27 // pred_fallthru
        _
      // Predicated region
      $region41: #{sepconv_pd_forward.1} parent=27 // pred_check
        %p382 = pneg %p210
      $region42: #{sepconv_pd_forward.1} parent=27 // pred_check_branch
        %384 = sbr.rel (%p382) target = $region44
      $region43: #{sepconv_pd_forward.1} parent=27 // pred_region
        %s385 = smul.u32 %s23, 4
        %s386 = sadd.s32 %s385, 3
        %p387 = scmp.lt.s32.totalorder %s22, 1
        %s388 = scalar_select %p387, %s22, 1
        %p389 = scmp.lt.s32.totalorder %s386, 9
        %s390 = scalar_select %p389, %s386, 9
        %s391 = smul.addr %s390, 2
        %s392 = smul.addr %s388, 20
        %s393 = sadd.s32 %s391, %s392
        %s394 = smul.addr %s393, 4
        %s395 = scalar_lea.vmem %s6, %s394
        %s396 = smul.u32 %s23, 4
        %s397 = sadd.s32 %s396, 3
      $region44: #{sepconv_pd_forward.1} parent=27 // pred_fallthru
        _
      // Predicated region
      $region45: #{sepconv_pd_forward.1} parent=27 // pred_check
        %p398 = pneg %p242
      $region46: #{sepconv_pd_forward.1} parent=27 // pred_check_branch
        %400 = sbr.rel (%p398) target = $region48
      $region47: #{sepconv_pd_forward.1} parent=27 // pred_region
        %s401 = smul.u32 %s23, 4
        %s402 = sadd.s32 %s401, 4
        %p403 = scmp.lt.s32.totalorder %s22, 1
        %s404 = scalar_select %p403, %s22, 1
        %p405 = scmp.lt.s32.totalorder %s402, 9
        %s406 = scalar_select %p405, %s402, 9
        %s407 = smul.addr %s406, 2
        %s408 = smul.addr %s404, 20
        %s409 = sadd.s32 %s407, %s408
        %s410 = smul.addr %s409, 4
        %s411 = scalar_lea.vmem %s7, %s410
        %s412 = smul.u32 %s23, 4
        %s413 = sadd.s32 %s412, 4
      $region48: #{sepconv_pd_forward.1} parent=27 // pred_fallthru
        _
      // Predicated region
      $region49: #{sepconv_pd_forward.1} parent=27 // pred_check
        %p414 = pneg %p274
      $region50: #{sepconv_pd_forward.1} parent=27 // pred_check_branch
        %416 = sbr.rel (%p414) target = $region52
      $region51: #{sepconv_pd_forward.1} parent=27 // pred_region
        %s417 = smul.u32 %s23, 4
        %s418 = sadd.s32 %s417, 5
        %p419 = scmp.lt.s32.totalorder %s22, 1
        %s420 = scalar_select %p419, %s22, 1
        %p421 = scmp.lt.s32.totalorder %s418, 9
        %s422 = scalar_select %p421, %s418, 9
        %s423 = smul.addr %s422, 2
        %s424 = smul.addr %s420, 20
        %s425 = sadd.s32 %s423, %s424
        %s426 = smul.addr %s425, 4
        %s427 = scalar_lea.vmem %s8, %s426
        %s428 = smul.u32 %s23, 4
        %s429 = sadd.s32 %s428, 5
      $region52: #{sepconv_pd_forward.1} parent=27 // pred_fallthru
        _
    $region28: #{sepconv_pd_forward.1} parent=5 // pred_fallthru
      _
    %p430 = scmp.le.s32.totalorder 1, %s15
    %p431 = scmp.lt.s32.totalorder %s15, 5
    %p432 = pnand %p430, %p431
    %p433 = pneg %p432
    // Predicated region
    $region53: #{sepconv_pd_forward.1} parent=5 // pred_check
      _
    $region54: #{sepconv_pd_forward.1} parent=5 // pred_check_branch
      %435 = sbr.rel (%p432) target = $region56
    $region55: #{sepconv_pd_forward.1} parent=5 // pred_region
      %s436 = ssub.s32 %s15, 1
      %p437 = pneg %p48
      %p438 = pneg %p45
      %p439 = pneg %p69
      %p440 = pneg %p66
      %p441 = pneg %p90
      %p442 = pneg %p87
      %s443 = smul.u32 %s25, 4
      %p444 = scmp.lt.s32.totalorder %s24, 1
      %s445 = scalar_select %p444, %s24, 1
      %p446 = scmp.lt.s32.totalorder %s443, 9
      %s447 = scalar_select %p446, %s443, 9
      %s448 = smul.addr %s447, 2
      %s449 = smul.addr %s445, 20
      %s450 = sadd.s32 %s448, %s449
      %s451 = smul.addr %s450, 4
      %s452 = scalar_lea.vmem %s3, %s451
      %p453 = pneg %p120
      %p454 = pneg %p117
      %s455 = smul.u32 %s25, 4
      %s456 = sadd.s32 %s455, 1
      %p457 = scmp.lt.s32.totalorder %s24, 1
      %s458 = scalar_select %p457, %s24, 1
      %p459 = scmp.lt.s32.totalorder %s456, 9
      %s460 = scalar_select %p459, %s456, 9
      %s461 = smul.addr %s460, 2
      %s462 = smul.addr %s458, 20
      %s463 = sadd.s32 %s461, %s462
      %s464 = smul.addr %s463, 4
      %s465 = scalar_lea.vmem %s4, %s464
      %p466 = pneg %p152
      %p467 = pneg %p149
      %s468 = smul.u32 %s25, 4
      %s469 = sadd.s32 %s468, 2
      %p470 = scmp.lt.s32.totalorder %s24, 1
      %s471 = scalar_select %p470, %s24, 1
      %p472 = scmp.lt.s32.totalorder %s469, 9
      %s473 = scalar_select %p472, %s469, 9
      %s474 = smul.addr %s473, 2
      %s475 = smul.addr %s471, 20
      %s476 = sadd.s32 %s474, %s475
      %s477 = smul.addr %s476, 4
      %s478 = scalar_lea.vmem %s5, %s477
      %p479 = pneg %p184
      %p480 = pneg %p181
      %s481 = smul.u32 %s25, 4
      %s482 = sadd.s32 %s481, 3
      %p483 = scmp.lt.s32.totalorder %s24, 1
      %s484 = scalar_select %p483, %s24, 1
      %p485 = scmp.lt.s32.totalorder %s482, 9
      %s486 = scalar_select %p485, %s482, 9
      %s487 = smul.addr %s486, 2
      %s488 = smul.addr %s484, 20
      %s489 = sadd.s32 %s487, %s488
      %s490 = smul.addr %s489, 4
      %s491 = scalar_lea.vmem %s6, %s490
      %p492 = pneg %p216
      %p493 = pneg %p213
      %s494 = smul.u32 %s25, 4
      %s495 = sadd.s32 %s494, 4
      %p496 = scmp.lt.s32.totalorder %s24, 1
      %s497 = scalar_select %p496, %s24, 1
      %p498 = scmp.lt.s32.totalorder %s495, 9
      %s499 = scalar_select %p498, %s495, 9
      %s500 = smul.addr %s499, 2
      %s501 = smul.addr %s497, 20
      %s502 = sadd.s32 %s500, %s501
      %s503 = smul.addr %s502, 4
      %s504 = scalar_lea.vmem %s7, %s503
      %p505 = pneg %p248
      %p506 = pneg %p245
      %s507 = smul.u32 %s25, 4
      %s508 = sadd.s32 %s507, 5
      %p509 = scmp.lt.s32.totalorder %s24, 1
      %s510 = scalar_select %p509, %s24, 1
      %p511 = scmp.lt.s32.totalorder %s508, 9
      %s512 = scalar_select %p511, %s508, 9
      %s513 = smul.addr %s512, 2
      %s514 = smul.addr %s510, 20
      %s515 = sadd.s32 %s513, %s514
      %s516 = smul.addr %s515, 4
      %s517 = scalar_lea.vmem %s8, %s516
      %p518 = pneg %p280
      %p519 = pneg %p277
      %p520 = pneg %p308
      %p521 = pneg %p305
      %s522 = smul.u32 4, %s25
      %p523 = scmp.lt.s32.totalorder %s24, 1
      %s524 = scalar_select %p523, %s24, 1
      %p525 = scmp.lt.s32.totalorder %s522, 7
      %s526 = scalar_select %p525, %s522, 7
      %s527 = smul.addr %s526, 2
      %s528 = smul.addr %s524, 16
      %s529 = sadd.s32 %s527, %s528
      %s530 = smul.addr %s529, 8
      %s531 = scalar_lea.vmem %s9, %s530
      %s532 = smul.u32 %s25, 4
      %p533 = scmp.lt.s32.totalorder %s24, 1
      %s534 = scalar_select %p533, %s24, 1
      %p535 = scmp.lt.s32.totalorder %s532, 9
      %s536 = scalar_select %p535, %s532, 9
      %s537 = smul.addr %s536, 2
      %s538 = smul.addr %s534, 20
      %s539 = sadd.s32 %s537, %s538
      %s540 = smul.addr %s539, 4
      %s541 = scalar_lea.vmem %s3, %s540
      %s542 = smul.u32 %s25, 4
      %s543 = smul.u32 %s25, 4
      %s544 = sadd.s32 %s543, 1
      %p545 = scmp.lt.s32.totalorder %s24, 1
      %s546 = scalar_select %p545, %s24, 1
      %p547 = scmp.lt.s32.totalorder %s544, 9
      %s548 = scalar_select %p547, %s544, 9
      %s549 = smul.addr %s548, 2
      %s550 = smul.addr %s546, 20
      %s551 = sadd.s32 %s549, %s550
      %s552 = smul.addr %s551, 4
      %s553 = scalar_lea.vmem %s4, %s552
      %s554 = smul.u32 %s25, 4
      %s555 = sadd.s32 %s554, 1
      %s556 = smul.u32 %s25, 4
      %s557 = sadd.s32 %s556, 2
      %p558 = scmp.lt.s32.totalorder %s24, 1
      %s559 = scalar_select %p558, %s24, 1
      %p560 = scmp.lt.s32.totalorder %s557, 9
      %s561 = scalar_select %p560, %s557, 9
      %s562 = smul.addr %s561, 2
      %s563 = smul.addr %s559, 20
      %s564 = sadd.s32 %s562, %s563
      %s565 = smul.addr %s564, 4
      %s566 = scalar_lea.vmem %s5, %s565
      %s567 = smul.u32 %s25, 4
      %s568 = sadd.s32 %s567, 2
      %s569 = smul.u32 %s25, 4
      %s570 = sadd.s32 %s569, 3
      %p571 = scmp.lt.s32.totalorder %s24, 1
      %s572 = scalar_select %p571, %s24, 1
      %p573 = scmp.lt.s32.totalorder %s570, 9
      %s574 = scalar_select %p573, %s570, 9
      %s575 = smul.addr %s574, 2
      %s576 = smul.addr %s572, 20
      %s577 = sadd.s32 %s575, %s576
      %s578 = smul.addr %s577, 4
      %s579 = scalar_lea.vmem %s6, %s578
      %s580 = smul.u32 %s25, 4
      %s581 = sadd.s32 %s580, 3
      %s582 = smul.u32 %s25, 4
      %s583 = sadd.s32 %s582, 4
      %p584 = scmp.lt.s32.totalorder %s24, 1
      %s585 = scalar_select %p584, %s24, 1
      %p586 = scmp.lt.s32.totalorder %s583, 9
      %s587 = scalar_select %p586, %s583, 9
      %s588 = smul.addr %s587, 2
      %s589 = smul.addr %s585, 20
      %s590 = sadd.s32 %s588, %s589
      %s591 = smul.addr %s590, 4
      %s592 = scalar_lea.vmem %s7, %s591
      %s593 = smul.u32 %s25, 4
      %s594 = sadd.s32 %s593, 4
      %s595 = smul.u32 %s25, 4
      %s596 = sadd.s32 %s595, 5
      %p597 = scmp.lt.s32.totalorder %s24, 1
      %s598 = scalar_select %p597, %s24, 1
      %p599 = scmp.lt.s32.totalorder %s596, 9
      %s600 = scalar_select %p599, %s596, 9
      %s601 = smul.addr %s600, 2
      %s602 = smul.addr %s598, 20
      %s603 = sadd.s32 %s601, %s602
      %s604 = smul.addr %s603, 4
      %s605 = scalar_lea.vmem %s8, %s604
      %s606 = smul.u32 %s25, 4
      %s607 = sadd.s32 %s606, 5
      %s608 = smul.u32 4, %s25
      %p609 = scmp.lt.s32.totalorder %s24, 1
      %s610 = scalar_select %p609, %s24, 1
      %p611 = scmp.lt.s32.totalorder %s608, 7
      %s612 = scalar_select %p611, %s608, 7
      %s613 = smul.addr %s612, 2
      %s614 = smul.addr %s610, 16
      %s615 = sadd.s32 %s613, %s614
      %s616 = smul.addr %s615, 8
      %s617 = scalar_lea.vmem %s9, %s616
      %s618 = smul.u32 4, %s25
      %v619 = vld [vmem:[%s2] sm:$0xff]
      %v620 = vld [vmem:[%s1] sm:$0xff]
      %v621 = vld [vmem:[%s541] sm:$0xff]
      %s622 = scalar_lea.vmem %s1, 8
      %v623 = vld [vmem:[%s622] sm:$0xff]
      %v624 = vld [vmem:[%s553] sm:$0xff]
      %626 = vst [vmem:[#allocation1] ss:$2 sm:$0xff] %v624
      %v627 = vld.sshfl [vmem:[#allocation1] sm:$0xff pattern:$0x75316420]
      %v628 = vld.sshfl [vmem:[#allocation1 + $0x8] sm:$0xff pattern:$0x75316420]
      %vm629 = vcmask 31744
      %v631 = vsel %vm629, %v623, 0
      %vm633 = vcmask 1043456
      %v634 = vsel %vm633, %v627, 0
      %v636 = vsel %vm633, %v628, 0
      %638 = vmatpush.msra.mxu0 0.0
      %639 = vmatpush.msra.mxu0 0.0
      %640 = vmatpush.msra.mxu0 0.0
      %641 = vmatpush.msra.mxu0 0.0
      %642 = vmatpush.msra.mxu0 0.0
      %643 = vmatpush.msra.mxu0 0.0
      %644 = vmatpush.msra.mxu0 0.0
      %645 = vmatpush.msra.mxu0 0.0
      %646 = vmatpush.msra.mxu0 0.0
      %647 = vmatpush.msra.mxu0 0.0
      %648 = vmatpush.msra.mxu0 0.0
      %649 = vmatpush.msra.mxu0 0.0
      %650 = vmatpush.msra.mxu0 0.0
      %651 = vmatpush.msra.mxu0 0.0
      %652 = vmatpush.msra.mxu0 0.0
      %653 = vmatpush.msra.mxu0 %v634
      %654 = vmatmul.f32.gmra.mxu0 %v631
      %v655 = vpop.f32.mrf.mxu0
      %v656 = vadd.f32 0.0, %v655
      %657 = vdwg.mxu0
      %658 = vmatpush.msra.mxu0 0.0
      %659 = vmatpush.msra.mxu0 0.0
      %660 = vmatpush.msra.mxu0 0.0
      %661 = vmatpush.msra.mxu0 0.0
      %662 = vmatpush.msra.mxu0 0.0
      %663 = vmatpush.msra.mxu0 0.0
      %664 = vmatpush.msra.mxu0 0.0
      %665 = vmatpush.msra.mxu0 0.0
      %666 = vmatpush.msra.mxu0 0.0
      %667 = vmatpush.msra.mxu0 0.0
      %668 = vmatpush.msra.mxu0 0.0
      %669 = vmatpush.msra.mxu0 0.0
      %670 = vmatpush.msra.mxu0 0.0
      %671 = vmatpush.msra.mxu0 0.0
      %672 = vmatpush.msra.mxu0 0.0
      %673 = vmatpush.msra.mxu0 %v636
      %674 = vmatmul.f32.gmra.mxu0 %v631
      %v675 = vpop.f32.mrf.mxu0
      %v676 = vadd.f32 0.0, %v675
      %677 = vdwg.mxu0
      %679 = vst [vmem:[#allocation1] ss:$2 sm:$0xff] %v621
      %v680 = vld.sshfl [vmem:[#allocation1] sm:$0xff pattern:$0x75316420]
      %v681 = vld.sshfl [vmem:[#allocation1 + $0x8] sm:$0xff pattern:$0x75316420]
      %v683 = vsel %vm629, %v620, 0
      %v685 = vsel %vm633, %v680, 0
      %v687 = vsel %vm633, %v681, 0
      %689 = vmatpush.msra.mxu0 0.0
      %690 = vmatpush.msra.mxu0 0.0
      %691 = vmatpush.msra.mxu0 0.0
      %692 = vmatpush.msra.mxu0 0.0
      %693 = vmatpush.msra.mxu0 0.0
      %694 = vmatpush.msra.mxu0 0.0
      %695 = vmatpush.msra.mxu0 0.0
      %696 = vmatpush.msra.mxu0 0.0
      %697 = vmatpush.msra.mxu0 0.0
      %698 = vmatpush.msra.mxu0 0.0
      %699 = vmatpush.msra.mxu0 0.0
      %700 = vmatpush.msra.mxu0 0.0
      %701 = vmatpush.msra.mxu0 0.0
      %702 = vmatpush.msra.mxu0 0.0
      %703 = vmatpush.msra.mxu0 0.0
      %704 = vmatpush.msra.mxu0 %v685
      %705 = vmatmul.f32.gmra.mxu0 %v683
      %v706 = vpop.f32.mrf.mxu0
      %v707 = vadd.f32 %v656, %v706
      %708 = vdwg.mxu0
      %709 = vmatpush.msra.mxu0 0.0
      %710 = vmatpush.msra.mxu0 0.0
      %711 = vmatpush.msra.mxu0 0.0
      %712 = vmatpush.msra.mxu0 0.0
      %713 = vmatpush.msra.mxu0 0.0
      %714 = vmatpush.msra.mxu0 0.0
      %715 = vmatpush.msra.mxu0 0.0
      %716 = vmatpush.msra.mxu0 0.0
      %717 = vmatpush.msra.mxu0 0.0
      %718 = vmatpush.msra.mxu0 0.0
      %719 = vmatpush.msra.mxu0 0.0
      %720 = vmatpush.msra.mxu0 0.0
      %721 = vmatpush.msra.mxu0 0.0
      %722 = vmatpush.msra.mxu0 0.0
      %723 = vmatpush.msra.mxu0 0.0
      %724 = vmatpush.msra.mxu0 %v687
      %725 = vmatmul.f32.gmra.mxu0 %v683
      %v726 = vpop.f32.mrf.mxu0
      %v727 = vadd.f32 %v676, %v726
      %728 = vdwg.mxu0
      %s729 = scalar_lea.vmem %s1, 16
      %v730 = vld [vmem:[%s729] sm:$0xff]
      %v731 = vld [vmem:[%s566] sm:$0xff]
      %733 = vst [vmem:[#allocation1] ss:$2 sm:$0xff] %v731
      %v734 = vld.sshfl [vmem:[#allocation1] sm:$0xff pattern:$0x75316420]
      %v735 = vld.sshfl [vmem:[#allocation1 + $0x8] sm:$0xff pattern:$0x75316420]
      %v737 = vsel %vm629, %v730, 0
      %v739 = vsel %vm633, %v734, 0
      %v741 = vsel %vm633, %v735, 0
      %743 = vmatpush.msra.mxu0 0.0
      %744 = vmatpush.msra.mxu0 0.0
      %745 = vmatpush.msra.mxu0 0.0
      %746 = vmatpush.msra.mxu0 0.0
      %747 = vmatpush.msra.mxu0 0.0
      %748 = vmatpush.msra.mxu0 0.0
      %749 = vmatpush.msra.mxu0 0.0
      %750 = vmatpush.msra.mxu0 0.0
      %751 = vmatpush.msra.mxu0 0.0
      %752 = vmatpush.msra.mxu0 0.0
      %753 = vmatpush.msra.mxu0 0.0
      %754 = vmatpush.msra.mxu0 0.0
      %755 = vmatpush.msra.mxu0 0.0
      %756 = vmatpush.msra.mxu0 0.0
      %757 = vmatpush.msra.mxu0 0.0
      %758 = vmatpush.msra.mxu0 %v739
      %759 = vmatmul.f32.gmra.mxu0 %v737
      %v760 = vpop.f32.mrf.mxu0
      %v761 = vadd.f32 0.0, %v760
      %762 = vdwg.mxu0
      %763 = vmatpush.msra.mxu0 0.0
      %764 = vmatpush.msra.mxu0 0.0
      %765 = vmatpush.msra.mxu0 0.0
      %766 = vmatpush.msra.mxu0 0.0
      %767 = vmatpush.msra.mxu0 0.0
      %768 = vmatpush.msra.mxu0 0.0
      %769 = vmatpush.msra.mxu0 0.0
      %770 = vmatpush.msra.mxu0 0.0
      %771 = vmatpush.msra.mxu0 0.0
      %772 = vmatpush.msra.mxu0 0.0
      %773 = vmatpush.msra.mxu0 0.0
      %774 = vmatpush.msra.mxu0 0.0
      %775 = vmatpush.msra.mxu0 0.0
      %776 = vmatpush.msra.mxu0 0.0
      %777 = vmatpush.msra.mxu0 0.0
      %778 = vmatpush.msra.mxu0 %v741
      %779 = vmatmul.f32.gmra.mxu0 %v737
      %v780 = vpop.f32.mrf.mxu0
      %v781 = vadd.f32 0.0, %v780
      %782 = vdwg.mxu0
      %v783 = vadd.f32 %v707, %v761
      %v784 = vadd.f32 %v727, %v781
      %787 = vrot.lane.b32.xlu0 %v783, 17
      %v788 = vpop.permute.xlu0 %787
      %789 = vrot.lane.b32.xlu0 %v784, 17
      %v790 = vpop.permute.xlu0 %789
      %vm791 = vcmask 138240
      %v792 = vsel %vm791, %v788, %v790
      %v796 = vsel %vm791, 0.0, %v788
      %v797 = vsel %vm791, %v790, 0.0
      %v798 = vld [vmem:[%s0] sm:$0x3]
      %v800 = vperm.slane %v798, 0
      %v801 = vperm.slane %v798, 1
      %v804 = vmul.f32 %v796, %v800
      %v805 = vmul.f32 %v792, %v801
      %s806 = scalar_lea.vmem %s0, 2
      %v807 = vld [vmem:[%s806] sm:$0x3]
      %v809 = vperm.slane %v807, 0
      %v810 = vperm.slane %v807, 1
      %811 = vrot.lane.b32.xlu0 %v809, 1
      %v812 = vpop.permute.xlu0 %811
      %813 = vrot.lane.b32.xlu0 %v810, 1
      %v814 = vpop.permute.xlu0 %813
      %vm815 = vcmask 7168
      %v816 = vsel %vm815, %v812, %v814
      %v820 = vmul.f32 %v796, %v812
      %v821 = vmul.f32 %v792, %v816
      %v822 = vmul.f32 %v797, %v814
      %s823 = scalar_lea.vmem %s0, 4
      %v824 = vld [vmem:[%s823] sm:$0x3]
      %v826 = vperm.slane %v824, 0
      %v827 = vperm.slane %v824, 1
      %828 = vrot.lane.b32.xlu0 %v826, 2
      %v829 = vpop.permute.xlu0 %828
      %830 = vrot.lane.b32.xlu0 %v827, 2
      %v831 = vpop.permute.xlu0 %830
      %vm832 = vcmask 15360
      %v833 = vsel %vm832, %v829, %v831
      %v837 = vmul.f32 %v796, %v829
      %v838 = vmul.f32 %v792, %v833
      %v839 = vmul.f32 %v797, %v831
      %s840 = scalar_lea.vmem %s0, 6
      %v841 = vld [vmem:[%s840] sm:$0x3]
      %v843 = vperm.slane %v841, 0
      %v844 = vperm.slane %v841, 1
      %845 = vrot.lane.b32.xlu0 %v843, 16
      %v846 = vpop.permute.xlu0 %845
      %847 = vrot.lane.b32.xlu0 %v844, 16
      %v848 = vpop.permute.xlu0 %847
      %vm849 = vcmask 130048
      %v850 = vsel %vm849, %v846, %v848
      %v854 = vmul.f32 %v796, %v846
      %v855 = vmul.f32 %v792, %v850
      %v856 = vmul.f32 %v797, %v848
      %s857 = scalar_lea.vmem %s0, 8
      %v858 = vld [vmem:[%s857] sm:$0x3]
      %v860 = vperm.slane %v858, 0
      %v861 = vperm.slane %v858, 1
      %862 = vrot.lane.b32.xlu0 %v860, 17
      %v863 = vpop.permute.xlu0 %862
      %864 = vrot.lane.b32.xlu0 %v861, 17
      %v865 = vpop.permute.xlu0 %864
      %v866 = vsel %vm791, %v863, %v865
      %v870 = vmul.f32 %v796, %v863
      %v871 = vmul.f32 %v792, %v866
      %v872 = vmul.f32 %v797, %v865
      %s873 = scalar_lea.vmem %s0, 10
      %v874 = vld [vmem:[%s873] sm:$0x3]
      %v876 = vperm.slane %v874, 0
      %v877 = vperm.slane %v874, 1
      %878 = vrot.lane.b32.xlu0 %v876, 18
      %v879 = vpop.permute.xlu0 %878
      %880 = vrot.lane.b32.xlu0 %v877, 18
      %v881 = vpop.permute.xlu0 %880
      %vm882 = vcmask 146432
      %v883 = vsel %vm882, %v879, %v881
      %v887 = vmul.f32 %v796, %v879
      %v888 = vmul.f32 %v792, %v883
      %v889 = vmul.f32 %v797, %v881
      %s890 = scalar_lea.vmem %s0, 12
      %v891 = vld [vmem:[%s890] sm:$0x3]
      %v893 = vperm.slane %v891, 0
      %v894 = vperm.slane %v891, 1
      %895 = vrot.lane.b32.xlu0 %v893, 32
      %v896 = vpop.permute.xlu0 %895
      %897 = vrot.lane.b32.xlu0 %v894, 32
      %v898 = vpop.permute.xlu0 %897
      %vm899 = vcmask 261120
      %v900 = vsel %vm899, %v896, %v898
      %v904 = vmul.f32 %v796, %v896
      %v905 = vmul.f32 %v792, %v900
      %v906 = vmul.f32 %v797, %v898
      %s907 = scalar_lea.vmem %s0, 14
      %v908 = vld [vmem:[%s907] sm:$0x3]
      %v910 = vperm.slane %v908, 0
      %v911 = vperm.slane %v908, 1
      %912 = vrot.lane.b32.xlu0 %v910, 33
      %v913 = vpop.permute.xlu0 %912
      %914 = vrot.lane.b32.xlu0 %v911, 33
      %v915 = vpop.permute.xlu0 %914
      %vm916 = vcmask 269312
      %v917 = vsel %vm916, %v913, %v915
      %v921 = vmul.f32 %v796, %v913
      %v922 = vmul.f32 %v792, %v917
      %v923 = vmul.f32 %v797, %v915
      %s924 = scalar_lea.vmem %s0, 16
      %v925 = vld [vmem:[%s924] sm:$0x3]
      %v927 = vperm.slane %v925, 0
      %v928 = vperm.slane %v925, 1
      %929 = vrot.lane.b32.xlu0 %v927, 34
      %v930 = vpop.permute.xlu0 %929
      %931 = vrot.lane.b32.xlu0 %v928, 34
      %v932 = vpop.permute.xlu0 %931
      %vm933 = vcmask 277504
      %v934 = vsel %vm933, %v930, %v932
      %v938 = vmul.f32 %v796, %v930
      %v939 = vmul.f32 %v792, %v934
      %v940 = vmul.f32 %v797, %v932
      %944 = vrot.lane.b32.xlu0 %v820, 127
      %v945 = vpop.permute.xlu0 %944
      %946 = vrot.lane.b32.xlu0 %v821, 127
      %v947 = vpop.permute.xlu0 %946
      %948 = vrot.lane.b32.xlu0 %v822, 127
      %v949 = vpop.permute.xlu0 %948
      %vm950 = vcmask 1039360
      %v951 = vsel %vm950, %v945, %v947
      %v952 = vsel %vm950, %v947, %v949
      %958 = vrot.lane.b32.xlu0 %v837, 126
      %v959 = vpop.permute.xlu0 %958
      %960 = vrot.lane.b32.xlu0 %v838, 126
      %v961 = vpop.permute.xlu0 %960
      %962 = vrot.lane.b32.xlu0 %v839, 126
      %v963 = vpop.permute.xlu0 %962
      %vm964 = vcmask 1031168
      %v965 = vsel %vm964, %v959, %v961
      %v966 = vsel %vm964, %v961, %v963
      %972 = vrot.lane.b32.xlu0 %v854, 112
      %v973 = vpop.permute.xlu0 %972
      %974 = vrot.lane.b32.xlu0 %v855, 112
      %v975 = vpop.permute.xlu0 %974
      %976 = vrot.lane.b32.xlu0 %v856, 112
      %v977 = vpop.permute.xlu0 %976
      %vm978 = vcmask 916480
      %v979 = vsel %vm978, %v973, %v975
      %v980 = vsel %vm978, %v975, %v977
      %986 = vrot.lane.b32.xlu0 %v870, 111
      %v987 = vpop.permute.xlu0 %986
      %988 = vrot.lane.b32.xlu0 %v871, 111
      %v989 = vpop.permute.xlu0 %988
      %990 = vrot.lane.b32.xlu0 %v872, 111
      %v991 = vpop.permute.xlu0 %990
      %vm992 = vcmask 908288
      %v993 = vsel %vm992, %v987, %v989
      %v994 = vsel %vm992, %v989, %v991
      %1000 = vrot.lane.b32.xlu0 %v887, 110
      %v1001 = vpop.permute.xlu0 %1000
      %1002 = vrot.lane.b32.xlu0 %v888, 110
      %v1003 = vpop.permute.xlu0 %1002
      %1004 = vrot.lane.b32.xlu0 %v889, 110
      %v1005 = vpop.permute.xlu0 %1004
      %vm1006 = vcmask 900096
      %v1007 = vsel %vm1006, %v1001, %v1003
      %v1008 = vsel %vm1006, %v1003, %v1005
      %1014 = vrot.lane.b32.xlu0 %v904, 96
      %v1015 = vpop.permute.xlu0 %1014
      %1016 = vrot.lane.b32.xlu0 %v905, 96
      %v1017 = vpop.permute.xlu0 %1016
      %1018 = vrot.lane.b32.xlu0 %v906, 96
      %v1019 = vpop.permute.xlu0 %1018
      %vm1020 = vcmask 785408
      %v1021 = vsel %vm1020, %v1015, %v1017
      %v1022 = vsel %vm1020, %v1017, %v1019
      %1028 = vrot.lane.b32.xlu0 %v921, 95
      %v1029 = vpop.permute.xlu0 %1028
      %1030 = vrot.lane.b32.xlu0 %v922, 95
      %v1031 = vpop.permute.xlu0 %1030
      %1032 = vrot.lane.b32.xlu0 %v923, 95
      %v1033 = vpop.permute.xlu0 %1032
      %vm1034 = vcmask 777216
      %v1035 = vsel %vm1034, %v1029, %v1031
      %v1036 = vsel %vm1034, %v1031, %v1033
      %1042 = vrot.lane.b32.xlu0 %v938, 94
      %v1043 = vpop.permute.xlu0 %1042
      %1044 = vrot.lane.b32.xlu0 %v939, 94
      %v1045 = vpop.permute.xlu0 %1044
      %1046 = vrot.lane.b32.xlu0 %v940, 94
      %v1047 = vpop.permute.xlu0 %1046
      %vm1048 = vcmask 769024
      %v1049 = vsel %vm1048, %v1043, %v1045
      %v1050 = vsel %vm1048, %v1045, %v1047
      %vm1053 = vcmask 588800
      %v1055 = vsel %vm1053, %v619, 0
      %1057 = vmatpush.msra.mxu0 0.0
      %1058 = vmatpush.msra.mxu0 0.0
      %1059 = vmatpush.msra.mxu0 0.0
      %1060 = vmatpush.msra.mxu0 0.0
      %1061 = vmatpush.msra.mxu0 0.0
      %1062 = vmatpush.msra.mxu0 0.0
      %1063 = vmatpush.msra.mxu0 0.0
      %1064 = vmatpush.msra.mxu0 %v1049
      %1065 = vmatpush.msra.mxu0 %v1035
      %1066 = vmatpush.msra.mxu0 %v1021
      %1067 = vmatpush.msra.mxu0 %v1007
      %1068 = vmatpush.msra.mxu0 %v993
      %1069 = vmatpush.msra.mxu0 %v979
      %1070 = vmatpush.msra.mxu0 %v965
      %1071 = vmatpush.msra.mxu0 %v951
      %1072 = vmatpush.msra.mxu0 %v804
      %1073 = vmatmul.f32.gmra.mxu0 %v1055
      %v1074 = vpop.f32.mrf.mxu0
      %v1075 = vadd.f32 0.0, %v1074
      %1076 = vdwg.mxu0
      %1077 = vmatpush.msra.mxu0 0.0
      %1078 = vmatpush.msra.mxu0 0.0
      %1079 = vmatpush.msra.mxu0 0.0
      %1080 = vmatpush.msra.mxu0 0.0
      %1081 = vmatpush.msra.mxu0 0.0
      %1082 = vmatpush.msra.mxu0 0.0
      %1083 = vmatpush.msra.mxu0 0.0
      %1084 = vmatpush.msra.mxu0 %v1050
      %1085 = vmatpush.msra.mxu0 %v1036
      %1086 = vmatpush.msra.mxu0 %v1022
      %1087 = vmatpush.msra.mxu0 %v1008
      %1088 = vmatpush.msra.mxu0 %v994
      %1089 = vmatpush.msra.mxu0 %v980
      %1090 = vmatpush.msra.mxu0 %v966
      %1091 = vmatpush.msra.mxu0 %v952
      %1092 = vmatpush.msra.mxu0 %v805
      %1093 = vmatmul.f32.gmra.mxu0 %v1055
      %v1094 = vpop.f32.mrf.mxu0
      %v1095 = vadd.f32 0.0, %v1094
      %1096 = vdwg.mxu0
      %1097 = vst [vmem:[%s617] sm:$0xff] %v1075
      %1098 = vst [vmem:[%s617 + $0x8] sm:$0xff] %v1095
      %v1099 = vld [vmem:[%s1] sm:$0xff]
      %v1100 = vld [vmem:[%s553] sm:$0xff]
      %v1101 = vld [vmem:[%s622] sm:$0xff]
      %v1102 = vld [vmem:[%s566] sm:$0xff]
      %1104 = vst [vmem:[#allocation1] ss:$2 sm:$0xff] %v1102
      %v1105 = vld.sshfl [vmem:[#allocation1] sm:$0xff pattern:$0x75316420]
      %v1106 = vld.sshfl [vmem:[#allocation1 + $0x8] sm:$0xff pattern:$0x75316420]
      %v1108 = vsel %vm629, %v1101, 0
      %v1110 = vsel %vm633, %v1105, 0
      %v1112 = vsel %vm633, %v1106, 0
      %1114 = vmatpush.msra.mxu0 0.0
      %1115 = vmatpush.msra.mxu0 0.0
      %1116 = vmatpush.msra.mxu0 0.0
      %1117 = vmatpush.msra.mxu0 0.0
      %1118 = vmatpush.msra.mxu0 0.0
      %1119 = vmatpush.msra.mxu0 0.0
      %1120 = vmatpush.msra.mxu0 0.0
      %1121 = vmatpush.msra.mxu0 0.0
      %1122 = vmatpush.msra.mxu0 0.0
      %1123 = vmatpush.msra.mxu0 0.0
      %1124 = vmatpush.msra.mxu0 0.0
      %1125 = vmatpush.msra.mxu0 0.0
      %1126 = vmatpush.msra.mxu0 0.0
      %1127 = vmatpush.msra.mxu0 0.0
      %1128 = vmatpush.msra.mxu0 0.0
      %1129 = vmatpush.msra.mxu0 %v1110
      %1130 = vmatmul.f32.gmra.mxu0 %v1108
      %v1131 = vpop.f32.mrf.mxu0
      %v1132 = vadd.f32 0.0, %v1131
      %1133 = vdwg.mxu0
      %1134 = vmatpush.msra.mxu0 0.0
      %1135 = vmatpush.msra.mxu0 0.0
      %1136 = vmatpush.msra.mxu0 0.0
      %1137 = vmatpush.msra.mxu0 0.0
      %1138 = vmatpush.msra.mxu0 0.0
      %1139 = vmatpush.msra.mxu0 0.0
      %1140 = vmatpush.msra.mxu0 0.0
      %1141 = vmatpush.msra.mxu0 0.0
      %1142 = vmatpush.msra.mxu0 0.0
      %1143 = vmatpush.msra.mxu0 0.0
      %1144 = vmatpush.msra.mxu0 0.0
      %1145 = vmatpush.msra.mxu0 0.0
      %1146 = vmatpush.msra.mxu0 0.0
      %1147 = vmatpush.msra.mxu0 0.0
      %1148 = vmatpush.msra.mxu0 0.0
      %1149 = vmatpush.msra.mxu0 %v1112
      %1150 = vmatmul.f32.gmra.mxu0 %v1108
      %v1151 = vpop.f32.mrf.mxu0
      %v1152 = vadd.f32 0.0, %v1151
      %1153 = vdwg.mxu0
      %1155 = vst [vmem:[#allocation1] ss:$2 sm:$0xff] %v1100
      %v1156 = vld.sshfl [vmem:[#allocation1] sm:$0xff pattern:$0x75316420]
      %v1157 = vld.sshfl [vmem:[#allocation1 + $0x8] sm:$0xff pattern:$0x75316420]
      %v1159 = vsel %vm629, %v1099, 0
      %v1161 = vsel %vm633, %v1156, 0
      %v1163 = vsel %vm633, %v1157, 0
      %1165 = vmatpush.msra.mxu0 0.0
      %1166 = vmatpush.msra.mxu0 0.0
      %1167 = vmatpush.msra.mxu0 0.0
      %1168 = vmatpush.msra.mxu0 0.0
      %1169 = vmatpush.msra.mxu0 0.0
      %1170 = vmatpush.msra.mxu0 0.0
      %1171 = vmatpush.msra.mxu0 0.0
      %1172 = vmatpush.msra.mxu0 0.0
      %1173 = vmatpush.msra.mxu0 0.0
      %1174 = vmatpush.msra.mxu0 0.0
      %1175 = vmatpush.msra.mxu0 0.0
      %1176 = vmatpush.msra.mxu0 0.0
      %1177 = vmatpush.msra.mxu0 0.0
      %1178 = vmatpush.msra.mxu0 0.0
      %1179 = vmatpush.msra.mxu0 0.0
      %1180 = vmatpush.msra.mxu0 %v1161
      %1181 = vmatmul.f32.gmra.mxu0 %v1159
      %v1182 = vpop.f32.mrf.mxu0
      %v1183 = vadd.f32 %v1132, %v1182
      %1184 = vdwg.mxu0
      %1185 = vmatpush.msra.mxu0 0.0
      %1186 = vmatpush.msra.mxu0 0.0
      %1187 = vmatpush.msra.mxu0 0.0
      %1188 = vmatpush.msra.mxu0 0.0
      %1189 = vmatpush.msra.mxu0 0.0
      %1190 = vmatpush.msra.mxu0 0.0
      %1191 = vmatpush.msra.mxu0 0.0
      %1192 = vmatpush.msra.mxu0 0.0
      %1193 = vmatpush.msra.mxu0 0.0
      %1194 = vmatpush.msra.mxu0 0.0
      %1195 = vmatpush.msra.mxu0 0.0
      %1196 = vmatpush.msra.mxu0 0.0
      %1197 = vmatpush.msra.mxu0 0.0
      %1198 = vmatpush.msra.mxu0 0.0
      %1199 = vmatpush.msra.mxu0 0.0
      %1200 = vmatpush.msra.mxu0 %v1163
      %1201 = vmatmul.f32.gmra.mxu0 %v1159
      %v1202 = vpop.f32.mrf.mxu0
      %v1203 = vadd.f32 %v1152, %v1202
      %1204 = vdwg.mxu0
      %v1205 = vld [vmem:[%s729] sm:$0xff]
      %v1206 = vld [vmem:[%s579] sm:$0xff]
      %1208 = vst [vmem:[#allocation1] ss:$2 sm:$0xff] %v1206
      %v1209 = vld.sshfl [vmem:[#allocation1] sm:$0xff pattern:$0x75316420]
      %v1210 = vld.sshfl [vmem:[#allocation1 + $0x8] sm:$0xff pattern:$0x75316420]
      %v1212 = vsel %vm629, %v1205, 0
      %v1214 = vsel %vm633, %v1209, 0
      %v1216 = vsel %vm633, %v1210, 0
      %1218 = vmatpush.msra.mxu0 0.0
      %1219 = vmatpush.msra.mxu0 0.0
      %1220 = vmatpush.msra.mxu0 0.0
      %1221 = vmatpush.msra.mxu0 0.0
      %1222 = vmatpush.msra.mxu0 0.0
      %1223 = vmatpush.msra.mxu0 0.0
      %1224 = vmatpush.msra.mxu0 0.0
      %1225 = vmatpush.msra.mxu0 0.0
      %1226 = vmatpush.msra.mxu0 0.0
      %1227 = vmatpush.msra.mxu0 0.0
      %1228 = vmatpush.msra.mxu0 0.0
      %1229 = vmatpush.msra.mxu0 0.0
      %1230 = vmatpush.msra.mxu0 0.0
      %1231 = vmatpush.msra.mxu0 0.0
      %1232 = vmatpush.msra.mxu0 0.0
      %1233 = vmatpush.msra.mxu0 %v1214
      %1234 = vmatmul.f32.gmra.mxu0 %v1212
      %v1235 = vpop.f32.mrf.mxu0
      %v1236 = vadd.f32 0.0, %v1235
      %1237 = vdwg.mxu0
      %1238 = vmatpush.msra.mxu0 0.0
      %1239 = vmatpush.msra.mxu0 0.0
      %1240 = vmatpush.msra.mxu0 0.0
      %1241 = vmatpush.msra.mxu0 0.0
      %1242 = vmatpush.msra.mxu0 0.0
      %1243 = vmatpush.msra.mxu0 0.0
      %1244 = vmatpush.msra.mxu0 0.0
      %1245 = vmatpush.msra.mxu0 0.0
      %1246 = vmatpush.msra.mxu0 0.0
      %1247 = vmatpush.msra.mxu0 0.0
      %1248 = vmatpush.msra.mxu0 0.0
      %1249 = vmatpush.msra.mxu0 0.0
      %1250 = vmatpush.msra.mxu0 0.0
      %1251 = vmatpush.msra.mxu0 0.0
      %1252 = vmatpush.msra.mxu0 0.0
      %1253 = vmatpush.msra.mxu0 %v1216
      %1254 = vmatmul.f32.gmra.mxu0 %v1212
      %v1255 = vpop.f32.mrf.mxu0
      %v1256 = vadd.f32 0.0, %v1255
      %1257 = vdwg.mxu0
      %v1258 = vadd.f32 %v1183, %v1236
      %v1259 = vadd.f32 %v1203, %v1256
      %1262 = vrot.lane.b32.xlu0 %v1258, 17
      %v1263 = vpop.permute.xlu0 %1262
      %1264 = vrot.lane.b32.xlu0 %v1259, 17
      %v1265 = vpop.permute.xlu0 %1264
      %v1266 = vsel %vm791, %v1263, %v1265
      %v1270 = vsel %vm791, 0.0, %v1263
      %v1271 = vsel %vm791, %v1265, 0.0
      %v1272 = vld [vmem:[%s0] sm:$0x3]
      %v1274 = vperm.slane %v1272, 0
      %v1275 = vperm.slane %v1272, 1
      %v1278 = vmul.f32 %v1270, %v1274
      %v1279 = vmul.f32 %v1266, %v1275
      %v1280 = vld [vmem:[%s806] sm:$0x3]
      %v1282 = vperm.slane %v1280, 0
      %v1283 = vperm.slane %v1280, 1
      %1284 = vrot.lane.b32.xlu0 %v1282, 1
      %v1285 = vpop.permute.xlu0 %1284
      %1286 = vrot.lane.b32.xlu0 %v1283, 1
      %v1287 = vpop.permute.xlu0 %1286
      %v1288 = vsel %vm815, %v1285, %v1287
      %v1292 = vmul.f32 %v1270, %v1285
      %v1293 = vmul.f32 %v1266, %v1288
      %v1294 = vmul.f32 %v1271, %v1287
      %v1295 = vld [vmem:[%s823] sm:$0x3]
      %v1297 = vperm.slane %v1295, 0
      %v1298 = vperm.slane %v1295, 1
      %1299 = vrot.lane.b32.xlu0 %v1297, 2
      %v1300 = vpop.permute.xlu0 %1299
      %1301 = vrot.lane.b32.xlu0 %v1298, 2
      %v1302 = vpop.permute.xlu0 %1301
      %v1303 = vsel %vm832, %v1300, %v1302
      %v1307 = vmul.f32 %v1270, %v1300
      %v1308 = vmul.f32 %v1266, %v1303
      %v1309 = vmul.f32 %v1271, %v1302
      %v1310 = vld [vmem:[%s840] sm:$0x3]
      %v1312 = vperm.slane %v1310, 0
      %v1313 = vperm.slane %v1310, 1
      %1314 = vrot.lane.b32.xlu0 %v1312, 16
      %v1315 = vpop.permute.xlu0 %1314
      %1316 = vrot.lane.b32.xlu0 %v1313, 16
      %v1317 = vpop.permute.xlu0 %1316
      %v1318 = vsel %vm849, %v1315, %v1317
      %v1322 = vmul.f32 %v1270, %v1315
      %v1323 = vmul.f32 %v1266, %v1318
      %v1324 = vmul.f32 %v1271, %v1317
      %v1325 = vld [vmem:[%s857] sm:$0x3]
      %v1327 = vperm.slane %v1325, 0
      %v1328 = vperm.slane %v1325, 1
      %1329 = vrot.lane.b32.xlu0 %v1327, 17
      %v1330 = vpop.permute.xlu0 %1329
      %1331 = vrot.lane.b32.xlu0 %v1328, 17
      %v1332 = vpop.permute.xlu0 %1331
      %v1333 = vsel %vm791, %v1330, %v1332
      %v1337 = vmul.f32 %v1270, %v1330
      %v1338 = vmul.f32 %v1266, %v1333
      %v1339 = vmul.f32 %v1271, %v1332
      %v1340 = vld [vmem:[%s873] sm:$0x3]
      %v1342 = vperm.slane %v1340, 0
      %v1343 = vperm.slane %v1340, 1
      %1344 = vrot.lane.b32.xlu0 %v1342, 18
      %v1345 = vpop.permute.xlu0 %1344
      %1346 = vrot.lane.b32.xlu0 %v1343, 18
      %v1347 = vpop.permute.xlu0 %1346
      %v1348 = vsel %vm882, %v1345, %v1347
      %v1352 = vmul.f32 %v1270, %v1345
      %v1353 = vmul.f32 %v1266, %v1348
      %v1354 = vmul.f32 %v1271, %v1347
      %v1355 = vld [vmem:[%s890] sm:$0x3]
      %v1357 = vperm.slane %v1355, 0
      %v1358 = vperm.slane %v1355, 1
      %1359 = vrot.lane.b32.xlu0 %v1357, 32
      %v1360 = vpop.permute.xlu0 %1359
      %1361 = vrot.lane.b32.xlu0 %v1358, 32
      %v1362 = vpop.permute.xlu0 %1361
      %v1363 = vsel %vm899, %v1360, %v1362
      %v1367 = vmul.f32 %v1270, %v1360
      %v1368 = vmul.f32 %v1266, %v1363
      %v1369 = vmul.f32 %v1271, %v1362
      %v1370 = vld [vmem:[%s907] sm:$0x3]
      %v1372 = vperm.slane %v1370, 0
      %v1373 = vperm.slane %v1370, 1
      %1374 = vrot.lane.b32.xlu0 %v1372, 33
      %v1375 = vpop.permute.xlu0 %1374
      %1376 = vrot.lane.b32.xlu0 %v1373, 33
      %v1377 = vpop.permute.xlu0 %1376
      %v1378 = vsel %vm916, %v1375, %v1377
      %v1382 = vmul.f32 %v1270, %v1375
      %v1383 = vmul.f32 %v1266, %v1378
      %v1384 = vmul.f32 %v1271, %v1377
      %v1385 = vld [vmem:[%s924] sm:$0x3]
      %v1387 = vperm.slane %v1385, 0
      %v1388 = vperm.slane %v1385, 1
      %1389 = vrot.lane.b32.xlu0 %v1387, 34
      %v1390 = vpop.permute.xlu0 %1389
      %1391 = vrot.lane.b32.xlu0 %v1388, 34
      %v1392 = vpop.permute.xlu0 %1391
      %v1393 = vsel %vm933, %v1390, %v1392
      %v1397 = vmul.f32 %v1270, %v1390
      %v1398 = vmul.f32 %v1266, %v1393
      %v1399 = vmul.f32 %v1271, %v1392
      %1403 = vrot.lane.b32.xlu0 %v1292, 127
      %v1404 = vpop.permute.xlu0 %1403
      %1405 = vrot.lane.b32.xlu0 %v1293, 127
      %v1406 = vpop.permute.xlu0 %1405
      %1407 = vrot.lane.b32.xlu0 %v1294, 127
      %v1408 = vpop.permute.xlu0 %1407
      %v1409 = vsel %vm950, %v1404, %v1406
      %v1410 = vsel %vm950, %v1406, %v1408
      %1416 = vrot.lane.b32.xlu0 %v1307, 126
      %v1417 = vpop.permute.xlu0 %1416
      %1418 = vrot.lane.b32.xlu0 %v1308, 126
      %v1419 = vpop.permute.xlu0 %1418
      %1420 = vrot.lane.b32.xlu0 %v1309, 126
      %v1421 = vpop.permute.xlu0 %1420
      %v1422 = vsel %vm964, %v1417, %v1419
      %v1423 = vsel %vm964, %v1419, %v1421
      %1429 = vrot.lane.b32.xlu0 %v1322, 112
      %v1430 = vpop.permute.xlu0 %1429
      %1431 = vrot.lane.b32.xlu0 %v1323, 112
      %v1432 = vpop.permute.xlu0 %1431
      %1433 = vrot.lane.b32.xlu0 %v1324, 112
      %v1434 = vpop.permute.xlu0 %1433
      %v1435 = vsel %vm978, %v1430, %v1432
      %v1436 = vsel %vm978, %v1432, %v1434
      %1442 = vrot.lane.b32.xlu0 %v1337, 111
      %v1443 = vpop.permute.xlu0 %1442
      %1444 = vrot.lane.b32.xlu0 %v1338, 111
      %v1445 = vpop.permute.xlu0 %1444
      %1446 = vrot.lane.b32.xlu0 %v1339, 111
      %v1447 = vpop.permute.xlu0 %1446
      %v1448 = vsel %vm992, %v1443, %v1445
      %v1449 = vsel %vm992, %v1445, %v1447
      %1455 = vrot.lane.b32.xlu0 %v1352, 110
      %v1456 = vpop.permute.xlu0 %1455
      %1457 = vrot.lane.b32.xlu0 %v1353, 110
      %v1458 = vpop.permute.xlu0 %1457
      %1459 = vrot.lane.b32.xlu0 %v1354, 110
      %v1460 = vpop.permute.xlu0 %1459
      %v1461 = vsel %vm1006, %v1456, %v1458
      %v1462 = vsel %vm1006, %v1458, %v1460
      %1468 = vrot.lane.b32.xlu0 %v1367, 96
      %v1469 = vpop.permute.xlu0 %1468
      %1470 = vrot.lane.b32.xlu0 %v1368, 96
      %v1471 = vpop.permute.xlu0 %1470
      %1472 = vrot.lane.b32.xlu0 %v1369, 96
      %v1473 = vpop.permute.xlu0 %1472
      %v1474 = vsel %vm1020, %v1469, %v1471
      %v1475 = vsel %vm1020, %v1471, %v1473
      %1481 = vrot.lane.b32.xlu0 %v1382, 95
      %v1482 = vpop.permute.xlu0 %1481
      %1483 = vrot.lane.b32.xlu0 %v1383, 95
      %v1484 = vpop.permute.xlu0 %1483
      %1485 = vrot.lane.b32.xlu0 %v1384, 95
      %v1486 = vpop.permute.xlu0 %1485
      %v1487 = vsel %vm1034, %v1482, %v1484
      %v1488 = vsel %vm1034, %v1484, %v1486
      %1494 = vrot.lane.b32.xlu0 %v1397, 94
      %v1495 = vpop.permute.xlu0 %1494
      %1496 = vrot.lane.b32.xlu0 %v1398, 94
      %v1497 = vpop.permute.xlu0 %1496
      %1498 = vrot.lane.b32.xlu0 %v1399, 94
      %v1499 = vpop.permute.xlu0 %1498
      %v1500 = vsel %vm1048, %v1495, %v1497
      %v1501 = vsel %vm1048, %v1497, %v1499
      %1504 = vmatpush.msra.mxu0 0.0
      %1505 = vmatpush.msra.mxu0 0.0
      %1506 = vmatpush.msra.mxu0 0.0
      %1507 = vmatpush.msra.mxu0 0.0
      %1508 = vmatpush.msra.mxu0 0.0
      %1509 = vmatpush.msra.mxu0 0.0
      %1510 = vmatpush.msra.mxu0 0.0
      %1511 = vmatpush.msra.mxu0 %v1500
      %1512 = vmatpush.msra.mxu0 %v1487
      %1513 = vmatpush.msra.mxu0 %v1474
      %1514 = vmatpush.msra.mxu0 %v1461
      %1515 = vmatpush.msra.mxu0 %v1448
      %1516 = vmatpush.msra.mxu0 %v1435
      %1517 = vmatpush.msra.mxu0 %v1422
      %1518 = vmatpush.msra.mxu0 %v1409
      %1519 = vmatpush.msra.mxu0 %v1278
      %1520 = vmatmul.f32.gmra.mxu0 %v1055
      %v1521 = vpop.f32.mrf.mxu0
      %v1522 = vadd.f32 0.0, %v1521
      %1523 = vdwg.mxu0
      %1524 = vmatpush.msra.mxu0 0.0
      %1525 = vmatpush.msra.mxu0 0.0
      %1526 = vmatpush.msra.mxu0 0.0
      %1527 = vmatpush.msra.mxu0 0.0
      %1528 = vmatpush.msra.mxu0 0.0
      %1529 = vmatpush.msra.mxu0 0.0
      %1530 = vmatpush.msra.mxu0 0.0
      %1531 = vmatpush.msra.mxu0 %v1501
      %1532 = vmatpush.msra.mxu0 %v1488
      %1533 = vmatpush.msra.mxu0 %v1475
      %1534 = vmatpush.msra.mxu0 %v1462
      %1535 = vmatpush.msra.mxu0 %v1449
      %1536 = vmatpush.msra.mxu0 %v1436
      %1537 = vmatpush.msra.mxu0 %v1423
      %1538 = vmatpush.msra.mxu0 %v1410
      %1539 = vmatpush.msra.mxu0 %v1279
      %1540 = vmatmul.f32.gmra.mxu0 %v1055
      %v1541 = vpop.f32.mrf.mxu0
      %v1542 = vadd.f32 0.0, %v1541
      %1543 = vdwg.mxu0
      %s1544 = scalar_lea.vmem %s617, 16
      %1545 = vst [vmem:[%s1544] sm:$0xff] %v1522
      %1546 = vst [vmem:[%s1544 + $0x8] sm:$0xff] %v1542
      %v1547 = vld [vmem:[%s1] sm:$0xff]
      %v1548 = vld [vmem:[%s566] sm:$0xff]
      %v1549 = vld [vmem:[%s622] sm:$0xff]
      %v1550 = vld [vmem:[%s579] sm:$0xff]
      %1552 = vst [vmem:[#allocation1] ss:$2 sm:$0xff] %v1550
      %v1553 = vld.sshfl [vmem:[#allocation1] sm:$0xff pattern:$0x75316420]
      %v1554 = vld.sshfl [vmem:[#allocation1 + $0x8] sm:$0xff pattern:$0x75316420]
      %v1556 = vsel %vm629, %v1549, 0
      %v1558 = vsel %vm633, %v1553, 0
      %v1560 = vsel %vm633, %v1554, 0
      %1562 = vmatpush.msra.mxu0 0.0
      %1563 = vmatpush.msra.mxu0 0.0
      %1564 = vmatpush.msra.mxu0 0.0
      %1565 = vmatpush.msra.mxu0 0.0
      %1566 = vmatpush.msra.mxu0 0.0
      %1567 = vmatpush.msra.mxu0 0.0
      %1568 = vmatpush.msra.mxu0 0.0
      %1569 = vmatpush.msra.mxu0 0.0
      %1570 = vmatpush.msra.mxu0 0.0
      %1571 = vmatpush.msra.mxu0 0.0
      %1572 = vmatpush.msra.mxu0 0.0
      %1573 = vmatpush.msra.mxu0 0.0
      %1574 = vmatpush.msra.mxu0 0.0
      %1575 = vmatpush.msra.mxu0 0.0
      %1576 = vmatpush.msra.mxu0 0.0
      %1577 = vmatpush.msra.mxu0 %v1558
      %1578 = vmatmul.f32.gmra.mxu0 %v1556
      %v1579 = vpop.f32.mrf.mxu0
      %v1580 = vadd.f32 0.0, %v1579
      %1581 = vdwg.mxu0
      %1582 = vmatpush.msra.mxu0 0.0
      %1583 = vmatpush.msra.mxu0 0.0
      %1584 = vmatpush.msra.mxu0 0.0
      %1585 = vmatpush.msra.mxu0 0.0
      %1586 = vmatpush.msra.mxu0 0.0
      %1587 = vmatpush.msra.mxu0 0.0
      %1588 = vmatpush.msra.mxu0 0.0
      %1589 = vmatpush.msra.mxu0 0.0
      %1590 = vmatpush.msra.mxu0 0.0
      %1591 = vmatpush.msra.mxu0 0.0
      %1592 = vmatpush.msra.mxu0 0.0
      %1593 = vmatpush.msra.mxu0 0.0
      %1594 = vmatpush.msra.mxu0 0.0
      %1595 = vmatpush.msra.mxu0 0.0
      %1596 = vmatpush.msra.mxu0 0.0
      %1597 = vmatpush.msra.mxu0 %v1560
      %1598 = vmatmul.f32.gmra.mxu0 %v1556
      %v1599 = vpop.f32.mrf.mxu0
      %v1600 = vadd.f32 0.0, %v1599
      %1601 = vdwg.mxu0
      %1603 = vst [vmem:[#allocation1] ss:$2 sm:$0xff] %v1548
      %v1604 = vld.sshfl [vmem:[#allocation1] sm:$0xff pattern:$0x75316420]
      %v1605 = vld.sshfl [vmem:[#allocation1 + $0x8] sm:$0xff pattern:$0x75316420]
      %v1607 = vsel %vm629, %v1547, 0
      %v1609 = vsel %vm633, %v1604, 0
      %v1611 = vsel %vm633, %v1605, 0
      %1613 = vmatpush.msra.mxu0 0.0
      %1614 = vmatpush.msra.mxu0 0.0
      %1615 = vmatpush.msra.mxu0 0.0
      %1616 = vmatpush.msra.mxu0 0.0
      %1617 = vmatpush.msra.mxu0 0.0
      %1618 = vmatpush.msra.mxu0 0.0
      %1619 = vmatpush.msra.mxu0 0.0
      %1620 = vmatpush.msra.mxu0 0.0
      %1621 = vmatpush.msra.mxu0 0.0
      %1622 = vmatpush.msra.mxu0 0.0
      %1623 = vmatpush.msra.mxu0 0.0
      %1624 = vmatpush.msra.mxu0 0.0
      %1625 = vmatpush.msra.mxu0 0.0
      %1626 = vmatpush.msra.mxu0 0.0
      %1627 = vmatpush.msra.mxu0 0.0
      %1628 = vmatpush.msra.mxu0 %v1609
      %1629 = vmatmul.f32.gmra.mxu0 %v1607
      %v1630 = vpop.f32.mrf.mxu0
      %v1631 = vadd.f32 %v1580, %v1630
      %1632 = vdwg.mxu0
      %1633 = vmatpush.msra.mxu0 0.0
      %1634 = vmatpush.msra.mxu0 0.0
      %1635 = vmatpush.msra.mxu0 0.0
      %1636 = vmatpush.msra.mxu0 0.0
      %1637 = vmatpush.msra.mxu0 0.0
      %1638 = vmatpush.msra.mxu0 0.0
      %1639 = vmatpush.msra.mxu0 0.0
      %1640 = vmatpush.msra.mxu0 0.0
      %1641 = vmatpush.msra.mxu0 0.0
      %1642 = vmatpush.msra.mxu0 0.0
      %1643 = vmatpush.msra.mxu0 0.0
      %1644 = vmatpush.msra.mxu0 0.0
      %1645 = vmatpush.msra.mxu0 0.0
      %1646 = vmatpush.msra.mxu0 0.0
      %1647 = vmatpush.msra.mxu0 0.0
      %1648 = vmatpush.msra.mxu0 %v1611
      %1649 = vmatmul.f32.gmra.mxu0 %v1607
      %v1650 = vpop.f32.mrf.mxu0
      %v1651 = vadd.f32 %v1600, %v1650
      %1652 = vdwg.mxu0
      %v1653 = vld [vmem:[%s729] sm:$0xff]
      %v1654 = vld [vmem:[%s592] sm:$0xff]
      %1656 = vst [vmem:[#allocation1] ss:$2 sm:$0xff] %v1654
      %v1657 = vld.sshfl [vmem:[#allocation1] sm:$0xff pattern:$0x75316420]
      %v1658 = vld.sshfl [vmem:[#allocation1 + $0x8] sm:$0xff pattern:$0x75316420]
      %v1660 = vsel %vm629, %v1653, 0
      %v1662 = vsel %vm633, %v1657, 0
      %v1664 = vsel %vm633, %v1658, 0
      %1666 = vmatpush.msra.mxu0 0.0
      %1667 = vmatpush.msra.mxu0 0.0
      %1668 = vmatpush.msra.mxu0 0.0
      %1669 = vmatpush.msra.mxu0 0.0
      %1670 = vmatpush.msra.mxu0 0.0
      %1671 = vmatpush.msra.mxu0 0.0
      %1672 = vmatpush.msra.mxu0 0.0
      %1673 = vmatpush.msra.mxu0 0.0
      %1674 = vmatpush.msra.mxu0 0.0
      %1675 = vmatpush.msra.mxu0 0.0
      %1676 = vmatpush.msra.mxu0 0.0
      %1677 = vmatpush.msra.mxu0 0.0
      %1678 = vmatpush.msra.mxu0 0.0
      %1679 = vmatpush.msra.mxu0 0.0
      %1680 = vmatpush.msra.mxu0 0.0
      %1681 = vmatpush.msra.mxu0 %v1662
      %1682 = vmatmul.f32.gmra.mxu0 %v1660
      %v1683 = vpop.f32.mrf.mxu0
      %v1684 = vadd.f32 0.0, %v1683
      %1685 = vdwg.mxu0
      %1686 = vmatpush.msra.mxu0 0.0
      %1687 = vmatpush.msra.mxu0 0.0
      %1688 = vmatpush.msra.mxu0 0.0
      %1689 = vmatpush.msra.mxu0 0.0
      %1690 = vmatpush.msra.mxu0 0.0
      %1691 = vmatpush.msra.mxu0 0.0
      %1692 = vmatpush.msra.mxu0 0.0
      %1693 = vmatpush.msra.mxu0 0.0
      %1694 = vmatpush.msra.mxu0 0.0
      %1695 = vmatpush.msra.mxu0 0.0
      %1696 = vmatpush.msra.mxu0 0.0
      %1697 = vmatpush.msra.mxu0 0.0
      %1698 = vmatpush.msra.mxu0 0.0
      %1699 = vmatpush.msra.mxu0 0.0
      %1700 = vmatpush.msra.mxu0 0.0
      %1701 = vmatpush.msra.mxu0 %v1664
      %1702 = vmatmul.f32.gmra.mxu0 %v1660
      %v1703 = vpop.f32.mrf.mxu0
      %v1704 = vadd.f32 0.0, %v1703
      %1705 = vdwg.mxu0
      %v1706 = vadd.f32 %v1631, %v1684
      %v1707 = vadd.f32 %v1651, %v1704
      %1710 = vrot.lane.b32.xlu0 %v1706, 17
      %v1711 = vpop.permute.xlu0 %1710
      %1712 = vrot.lane.b32.xlu0 %v1707, 17
      %v1713 = vpop.permute.xlu0 %1712
      %v1714 = vsel %vm791, %v1711, %v1713
      %v1718 = vsel %vm791, 0.0, %v1711
      %v1719 = vsel %vm791, %v1713, 0.0
      %v1720 = vld [vmem:[%s0] sm:$0x3]
      %v1722 = vperm.slane %v1720, 0
      %v1723 = vperm.slane %v1720, 1
      %v1726 = vmul.f32 %v1718, %v1722
      %v1727 = vmul.f32 %v1714, %v1723
      %v1728 = vld [vmem:[%s806] sm:$0x3]
      %v1730 = vperm.slane %v1728, 0
      %v1731 = vperm.slane %v1728, 1
      %1732 = vrot.lane.b32.xlu0 %v1730, 1
      %v1733 = vpop.permute.xlu0 %1732
      %1734 = vrot.lane.b32.xlu0 %v1731, 1
      %v1735 = vpop.permute.xlu0 %1734
      %v1736 = vsel %vm815, %v1733, %v1735
      %v1740 = vmul.f32 %v1718, %v1733
      %v1741 = vmul.f32 %v1714, %v1736
      %v1742 = vmul.f32 %v1719, %v1735
      %v1743 = vld [vmem:[%s823] sm:$0x3]
      %v1745 = vperm.slane %v1743, 0
      %v1746 = vperm.slane %v1743, 1
      %1747 = vrot.lane.b32.xlu0 %v1745, 2
      %v1748 = vpop.permute.xlu0 %1747
      %1749 = vrot.lane.b32.xlu0 %v1746, 2
      %v1750 = vpop.permute.xlu0 %1749
      %v1751 = vsel %vm832, %v1748, %v1750
      %v1755 = vmul.f32 %v1718, %v1748
      %v1756 = vmul.f32 %v1714, %v1751
      %v1757 = vmul.f32 %v1719, %v1750
      %v1758 = vld [vmem:[%s840] sm:$0x3]
      %v1760 = vperm.slane %v1758, 0
      %v1761 = vperm.slane %v1758, 1
      %1762 = vrot.lane.b32.xlu0 %v1760, 16
      %v1763 = vpop.permute.xlu0 %1762
      %1764 = vrot.lane.b32.xlu0 %v1761, 16
      %v1765 = vpop.permute.xlu0 %1764
      %v1766 = vsel %vm849, %v1763, %v1765
      %v1770 = vmul.f32 %v1718, %v1763
      %v1771 = vmul.f32 %v1714, %v1766
      %v1772 = vmul.f32 %v1719, %v1765
      %v1773 = vld [vmem:[%s857] sm:$0x3]
      %v1775 = vperm.slane %v1773, 0
      %v1776 = vperm.slane %v1773, 1
      %1777 = vrot.lane.b32.xlu0 %v1775, 17
      %v1778 = vpop.permute.xlu0 %1777
      %1779 = vrot.lane.b32.xlu0 %v1776, 17
      %v1780 = vpop.permute.xlu0 %1779
      %v1781 = vsel %vm791, %v1778, %v1780
      %v1785 = vmul.f32 %v1718, %v1778
      %v1786 = vmul.f32 %v1714, %v1781
      %v1787 = vmul.f32 %v1719, %v1780
      %v1788 = vld [vmem:[%s873] sm:$0x3]
      %v1790 = vperm.slane %v1788, 0
      %v1791 = vperm.slane %v1788, 1
      %1792 = vrot.lane.b32.xlu0 %v1790, 18
      %v1793 = vpop.permute.xlu0 %1792
      %1794 = vrot.lane.b32.xlu0 %v1791, 18
      %v1795 = vpop.permute.xlu0 %1794
      %v1796 = vsel %vm882, %v1793, %v1795
      %v1800 = vmul.f32 %v1718, %v1793
      %v1801 = vmul.f32 %v1714, %v1796
      %v1802 = vmul.f32 %v1719, %v1795
      %v1803 = vld [vmem:[%s890] sm:$0x3]
      %v1805 = vperm.slane %v1803, 0
      %v1806 = vperm.slane %v1803, 1
      %1807 = vrot.lane.b32.xlu0 %v1805, 32
      %v1808 = vpop.permute.xlu0 %1807
      %1809 = vrot.lane.b32.xlu0 %v1806, 32
      %v1810 = vpop.permute.xlu0 %1809
      %v1811 = vsel %vm899, %v1808, %v1810
      %v1815 = vmul.f32 %v1718, %v1808
      %v1816 = vmul.f32 %v1714, %v1811
      %v1817 = vmul.f32 %v1719, %v1810
      %v1818 = vld [vmem:[%s907] sm:$0x3]
      %v1820 = vperm.slane %v1818, 0
      %v1821 = vperm.slane %v1818, 1
      %1822 = vrot.lane.b32.xlu0 %v1820, 33
      %v1823 = vpop.permute.xlu0 %1822
      %1824 = vrot.lane.b32.xlu0 %v1821, 33
      %v1825 = vpop.permute.xlu0 %1824
      %v1826 = vsel %vm916, %v1823, %v1825
      %v1830 = vmul.f32 %v1718, %v1823
      %v1831 = vmul.f32 %v1714, %v1826
      %v1832 = vmul.f32 %v1719, %v1825
      %v1833 = vld [vmem:[%s924] sm:$0x3]
      %v1835 = vperm.slane %v1833, 0
      %v1836 = vperm.slane %v1833, 1
      %1837 = vrot.lane.b32.xlu0 %v1835, 34
      %v1838 = vpop.permute.xlu0 %1837
      %1839 = vrot.lane.b32.xlu0 %v1836, 34
      %v1840 = vpop.permute.xlu0 %1839
      %v1841 = vsel %vm933, %v1838, %v1840
      %v1845 = vmul.f32 %v1718, %v1838
      %v1846 = vmul.f32 %v1714, %v1841
      %v1847 = vmul.f32 %v1719, %v1840
      %1851 = vrot.lane.b32.xlu0 %v1740, 127
      %v1852 = vpop.permute.xlu0 %1851
      %1853 = vrot.lane.b32.xlu0 %v1741, 127
      %v1854 = vpop.permute.xlu0 %1853
      %1855 = vrot.lane.b32.xlu0 %v1742, 127
      %v1856 = vpop.permute.xlu0 %1855
      %v1857 = vsel %vm950, %v1852, %v1854
      %v1858 = vsel %vm950, %v1854, %v1856
      %1864 = vrot.lane.b32.xlu0 %v1755, 126
      %v1865 = vpop.permute.xlu0 %1864
      %1866 = vrot.lane.b32.xlu0 %v1756, 126
      %v1867 = vpop.permute.xlu0 %1866
      %1868 = vrot.lane.b32.xlu0 %v1757, 126
      %v1869 = vpop.permute.xlu0 %1868
      %v1870 = vsel %vm964, %v1865, %v1867
      %v1871 = vsel %vm964, %v1867, %v1869
      %1877 = vrot.lane.b32.xlu0 %v1770, 112
      %v1878 = vpop.permute.xlu0 %1877
      %1879 = vrot.lane.b32.xlu0 %v1771, 112
      %v1880 = vpop.permute.xlu0 %1879
      %1881 = vrot.lane.b32.xlu0 %v1772, 112
      %v1882 = vpop.permute.xlu0 %1881
      %v1883 = vsel %vm978, %v1878, %v1880
      %v1884 = vsel %vm978, %v1880, %v1882
      %1890 = vrot.lane.b32.xlu0 %v1785, 111
      %v1891 = vpop.permute.xlu0 %1890
      %1892 = vrot.lane.b32.xlu0 %v1786, 111
      %v1893 = vpop.permute.xlu0 %1892
      %1894 = vrot.lane.b32.xlu0 %v1787, 111
      %v1895 = vpop.permute.xlu0 %1894
      %v1896 = vsel %vm992, %v1891, %v1893
      %v1897 = vsel %vm992, %v1893, %v1895
      %1903 = vrot.lane.b32.xlu0 %v1800, 110
      %v1904 = vpop.permute.xlu0 %1903
      %1905 = vrot.lane.b32.xlu0 %v1801, 110
      %v1906 = vpop.permute.xlu0 %1905
      %1907 = vrot.lane.b32.xlu0 %v1802, 110
      %v1908 = vpop.permute.xlu0 %1907
      %v1909 = vsel %vm1006, %v1904, %v1906
      %v1910 = vsel %vm1006, %v1906, %v1908
      %1916 = vrot.lane.b32.xlu0 %v1815, 96
      %v1917 = vpop.permute.xlu0 %1916
      %1918 = vrot.lane.b32.xlu0 %v1816, 96
      %v1919 = vpop.permute.xlu0 %1918
      %1920 = vrot.lane.b32.xlu0 %v1817, 96
      %v1921 = vpop.permute.xlu0 %1920
      %v1922 = vsel %vm1020, %v1917, %v1919
      %v1923 = vsel %vm1020, %v1919, %v1921
      %1929 = vrot.lane.b32.xlu0 %v1830, 95
      %v1930 = vpop.permute.xlu0 %1929
      %1931 = vrot.lane.b32.xlu0 %v1831, 95
      %v1932 = vpop.permute.xlu0 %1931
      %1933 = vrot.lane.b32.xlu0 %v1832, 95
      %v1934 = vpop.permute.xlu0 %1933
      %v1935 = vsel %vm1034, %v1930, %v1932
      %v1936 = vsel %vm1034, %v1932, %v1934
      %1942 = vrot.lane.b32.xlu0 %v1845, 94
      %v1943 = vpop.permute.xlu0 %1942
      %1944 = vrot.lane.b32.xlu0 %v1846, 94
      %v1945 = vpop.permute.xlu0 %1944
      %1946 = vrot.lane.b32.xlu0 %v1847, 94
      %v1947 = vpop.permute.xlu0 %1946
      %v1948 = vsel %vm1048, %v1943, %v1945
      %v1949 = vsel %vm1048, %v1945, %v1947
      %1952 = vmatpush.msra.mxu0 0.0
      %1953 = vmatpush.msra.mxu0 0.0
      %1954 = vmatpush.msra.mxu0 0.0
      %1955 = vmatpush.msra.mxu0 0.0
      %1956 = vmatpush.msra.mxu0 0.0
      %1957 = vmatpush.msra.mxu0 0.0
      %1958 = vmatpush.msra.mxu0 0.0
      %1959 = vmatpush.msra.mxu0 %v1948
      %1960 = vmatpush.msra.mxu0 %v1935
      %1961 = vmatpush.msra.mxu0 %v1922
      %1962 = vmatpush.msra.mxu0 %v1909
      %1963 = vmatpush.msra.mxu0 %v1896
      %1964 = vmatpush.msra.mxu0 %v1883
      %1965 = vmatpush.msra.mxu0 %v1870
      %1966 = vmatpush.msra.mxu0 %v1857
      %1967 = vmatpush.msra.mxu0 %v1726
      %1968 = vmatmul.f32.gmra.mxu0 %v1055
      %v1969 = vpop.f32.mrf.mxu0
      %v1970 = vadd.f32 0.0, %v1969
      %1971 = vdwg.mxu0
      %1972 = vmatpush.msra.mxu0 0.0
      %1973 = vmatpush.msra.mxu0 0.0
      %1974 = vmatpush.msra.mxu0 0.0
      %1975 = vmatpush.msra.mxu0 0.0
      %1976 = vmatpush.msra.mxu0 0.0
      %1977 = vmatpush.msra.mxu0 0.0
      %1978 = vmatpush.msra.mxu0 0.0
      %1979 = vmatpush.msra.mxu0 %v1949
      %1980 = vmatpush.msra.mxu0 %v1936
      %1981 = vmatpush.msra.mxu0 %v1923
      %1982 = vmatpush.msra.mxu0 %v1910
      %1983 = vmatpush.msra.mxu0 %v1897
      %1984 = vmatpush.msra.mxu0 %v1884
      %1985 = vmatpush.msra.mxu0 %v1871
      %1986 = vmatpush.msra.mxu0 %v1858
      %1987 = vmatpush.msra.mxu0 %v1727
      %1988 = vmatmul.f32.gmra.mxu0 %v1055
      %v1989 = vpop.f32.mrf.mxu0
      %v1990 = vadd.f32 0.0, %v1989
      %1991 = vdwg.mxu0
      %s1992 = scalar_lea.vmem %s617, 32
      %1993 = vst [vmem:[%s1992] sm:$0xff] %v1970
      %1994 = vst [vmem:[%s1992 + $0x8] sm:$0xff] %v1990
      %v1995 = vld [vmem:[%s1] sm:$0xff]
      %v1996 = vld [vmem:[%s579] sm:$0xff]
      %v1997 = vld [vmem:[%s622] sm:$0xff]
      %v1998 = vld [vmem:[%s592] sm:$0xff]
      %2000 = vst [vmem:[#allocation1] ss:$2 sm:$0xff] %v1998
      %v2001 = vld.sshfl [vmem:[#allocation1] sm:$0xff pattern:$0x75316420]
      %v2002 = vld.sshfl [vmem:[#allocation1 + $0x8] sm:$0xff pattern:$0x75316420]
      %v2004 = vsel %vm629, %v1997, 0
      %v2006 = vsel %vm633, %v2001, 0
      %v2008 = vsel %vm633, %v2002, 0
      %2010 = vmatpush.msra.mxu0 0.0
      %2011 = vmatpush.msra.mxu0 0.0
      %2012 = vmatpush.msra.mxu0 0.0
      %2013 = vmatpush.msra.mxu0 0.0
      %2014 = vmatpush.msra.mxu0 0.0
      %2015 = vmatpush.msra.mxu0 0.0
      %2016 = vmatpush.msra.mxu0 0.0
      %2017 = vmatpush.msra.mxu0 0.0
      %2018 = vmatpush.msra.mxu0 0.0
      %2019 = vmatpush.msra.mxu0 0.0
      %2020 = vmatpush.msra.mxu0 0.0
      %2021 = vmatpush.msra.mxu0 0.0
      %2022 = vmatpush.msra.mxu0 0.0
      %2023 = vmatpush.msra.mxu0 0.0
      %2024 = vmatpush.msra.mxu0 0.0
      %2025 = vmatpush.msra.mxu0 %v2006
      %2026 = vmatmul.f32.gmra.mxu0 %v2004
      %v2027 = vpop.f32.mrf.mxu0
      %v2028 = vadd.f32 0.0, %v2027
      %2029 = vdwg.mxu0
      %2030 = vmatpush.msra.mxu0 0.0
      %2031 = vmatpush.msra.mxu0 0.0
      %2032 = vmatpush.msra.mxu0 0.0
      %2033 = vmatpush.msra.mxu0 0.0
      %2034 = vmatpush.msra.mxu0 0.0
      %2035 = vmatpush.msra.mxu0 0.0
      %2036 = vmatpush.msra.mxu0 0.0
      %2037 = vmatpush.msra.mxu0 0.0
      %2038 = vmatpush.msra.mxu0 0.0
      %2039 = vmatpush.msra.mxu0 0.0
      %2040 = vmatpush.msra.mxu0 0.0
      %2041 = vmatpush.msra.mxu0 0.0
      %2042 = vmatpush.msra.mxu0 0.0
      %2043 = vmatpush.msra.mxu0 0.0
      %2044 = vmatpush.msra.mxu0 0.0
      %2045 = vmatpush.msra.mxu0 %v2008
      %2046 = vmatmul.f32.gmra.mxu0 %v2004
      %v2047 = vpop.f32.mrf.mxu0
      %v2048 = vadd.f32 0.0, %v2047
      %2049 = vdwg.mxu0
      %2051 = vst [vmem:[#allocation1] ss:$2 sm:$0xff] %v1996
      %v2052 = vld.sshfl [vmem:[#allocation1] sm:$0xff pattern:$0x75316420]
      %v2053 = vld.sshfl [vmem:[#allocation1 + $0x8] sm:$0xff pattern:$0x75316420]
      %v2055 = vsel %vm629, %v1995, 0
      %v2057 = vsel %vm633, %v2052, 0
      %v2059 = vsel %vm633, %v2053, 0
      %2061 = vmatpush.msra.mxu0 0.0
      %2062 = vmatpush.msra.mxu0 0.0
      %2063 = vmatpush.msra.mxu0 0.0
      %2064 = vmatpush.msra.mxu0 0.0
      %2065 = vmatpush.msra.mxu0 0.0
      %2066 = vmatpush.msra.mxu0 0.0
      %2067 = vmatpush.msra.mxu0 0.0
      %2068 = vmatpush.msra.mxu0 0.0
      %2069 = vmatpush.msra.mxu0 0.0
      %2070 = vmatpush.msra.mxu0 0.0
      %2071 = vmatpush.msra.mxu0 0.0
      %2072 = vmatpush.msra.mxu0 0.0
      %2073 = vmatpush.msra.mxu0 0.0
      %2074 = vmatpush.msra.mxu0 0.0
      %2075 = vmatpush.msra.mxu0 0.0
      %2076 = vmatpush.msra.mxu0 %v2057
      %2077 = vmatmul.f32.gmra.mxu0 %v2055
      %v2078 = vpop.f32.mrf.mxu0
      %v2079 = vadd.f32 %v2028, %v2078
      %2080 = vdwg.mxu0
      %2081 = vmatpush.msra.mxu0 0.0
      %2082 = vmatpush.msra.mxu0 0.0
      %2083 = vmatpush.msra.mxu0 0.0
      %2084 = vmatpush.msra.mxu0 0.0
      %2085 = vmatpush.msra.mxu0 0.0
      %2086 = vmatpush.msra.mxu0 0.0
      %2087 = vmatpush.msra.mxu0 0.0
      %2088 = vmatpush.msra.mxu0 0.0
      %2089 = vmatpush.msra.mxu0 0.0
      %2090 = vmatpush.msra.mxu0 0.0
      %2091 = vmatpush.msra.mxu0 0.0
      %2092 = vmatpush.msra.mxu0 0.0
      %2093 = vmatpush.msra.mxu0 0.0
      %2094 = vmatpush.msra.mxu0 0.0
      %2095 = vmatpush.msra.mxu0 0.0
      %2096 = vmatpush.msra.mxu0 %v2059
      %2097 = vmatmul.f32.gmra.mxu0 %v2055
      %v2098 = vpop.f32.mrf.mxu0
      %v2099 = vadd.f32 %v2048, %v2098
      %2100 = vdwg.mxu0
      %v2101 = vld [vmem:[%s729] sm:$0xff]
      %v2102 = vld [vmem:[%s605] sm:$0xff]
      %2104 = vst [vmem:[#allocation1] ss:$2 sm:$0xff] %v2102
      %v2105 = vld.sshfl [vmem:[#allocation1] sm:$0xff pattern:$0x75316420]
      %v2106 = vld.sshfl [vmem:[#allocation1 + $0x8] sm:$0xff pattern:$0x75316420]
      %v2108 = vsel %vm629, %v2101, 0
      %v2110 = vsel %vm633, %v2105, 0
      %v2112 = vsel %vm633, %v2106, 0
      %2114 = vmatpush.msra.mxu0 0.0
      %2115 = vmatpush.msra.mxu0 0.0
      %2116 = vmatpush.msra.mxu0 0.0
      %2117 = vmatpush.msra.mxu0 0.0
      %2118 = vmatpush.msra.mxu0 0.0
      %2119 = vmatpush.msra.mxu0 0.0
      %2120 = vmatpush.msra.mxu0 0.0
      %2121 = vmatpush.msra.mxu0 0.0
      %2122 = vmatpush.msra.mxu0 0.0
      %2123 = vmatpush.msra.mxu0 0.0
      %2124 = vmatpush.msra.mxu0 0.0
      %2125 = vmatpush.msra.mxu0 0.0
      %2126 = vmatpush.msra.mxu0 0.0
      %2127 = vmatpush.msra.mxu0 0.0
      %2128 = vmatpush.msra.mxu0 0.0
      %2129 = vmatpush.msra.mxu0 %v2110
      %2130 = vmatmul.f32.gmra.mxu0 %v2108
      %v2131 = vpop.f32.mrf.mxu0
      %v2132 = vadd.f32 0.0, %v2131
      %2133 = vdwg.mxu0
      %2134 = vmatpush.msra.mxu0 0.0
      %2135 = vmatpush.msra.mxu0 0.0
      %2136 = vmatpush.msra.mxu0 0.0
      %2137 = vmatpush.msra.mxu0 0.0
      %2138 = vmatpush.msra.mxu0 0.0
      %2139 = vmatpush.msra.mxu0 0.0
      %2140 = vmatpush.msra.mxu0 0.0
      %2141 = vmatpush.msra.mxu0 0.0
      %2142 = vmatpush.msra.mxu0 0.0
      %2143 = vmatpush.msra.mxu0 0.0
      %2144 = vmatpush.msra.mxu0 0.0
      %2145 = vmatpush.msra.mxu0 0.0
      %2146 = vmatpush.msra.mxu0 0.0
      %2147 = vmatpush.msra.mxu0 0.0
      %2148 = vmatpush.msra.mxu0 0.0
      %2149 = vmatpush.msra.mxu0 %v2112
      %2150 = vmatmul.f32.gmra.mxu0 %v2108
      %v2151 = vpop.f32.mrf.mxu0
      %v2152 = vadd.f32 0.0, %v2151
      %2153 = vdwg.mxu0
      %v2154 = vadd.f32 %v2079, %v2132
      %v2155 = vadd.f32 %v2099, %v2152
      %2158 = vrot.lane.b32.xlu0 %v2154, 17
      %v2159 = vpop.permute.xlu0 %2158
      %2160 = vrot.lane.b32.xlu0 %v2155, 17
      %v2161 = vpop.permute.xlu0 %2160
      %v2162 = vsel %vm791, %v2159, %v2161
      %v2166 = vsel %vm791, 0.0, %v2159
      %v2167 = vsel %vm791, %v2161, 0.0
      %v2168 = vld [vmem:[%s0] sm:$0x3]
      %v2170 = vperm.slane %v2168, 0
      %v2171 = vperm.slane %v2168, 1
      %v2174 = vmul.f32 %v2166, %v2170
      %v2175 = vmul.f32 %v2162, %v2171
      %v2176 = vld [vmem:[%s806] sm:$0x3]
      %v2178 = vperm.slane %v2176, 0
      %v2179 = vperm.slane %v2176, 1
      %2180 = vrot.lane.b32.xlu0 %v2178, 1
      %v2181 = vpop.permute.xlu0 %2180
      %2182 = vrot.lane.b32.xlu0 %v2179, 1
      %v2183 = vpop.permute.xlu0 %2182
      %v2184 = vsel %vm815, %v2181, %v2183
      %v2188 = vmul.f32 %v2166, %v2181
      %v2189 = vmul.f32 %v2162, %v2184
      %v2190 = vmul.f32 %v2167, %v2183
      %v2191 = vld [vmem:[%s823] sm:$0x3]
      %v2193 = vperm.slane %v2191, 0
      %v2194 = vperm.slane %v2191, 1
      %2195 = vrot.lane.b32.xlu0 %v2193, 2
      %v2196 = vpop.permute.xlu0 %2195
      %2197 = vrot.lane.b32.xlu0 %v2194, 2
      %v2198 = vpop.permute.xlu0 %2197
      %v2199 = vsel %vm832, %v2196, %v2198
      %v2203 = vmul.f32 %v2166, %v2196
      %v2204 = vmul.f32 %v2162, %v2199
      %v2205 = vmul.f32 %v2167, %v2198
      %v2206 = vld [vmem:[%s840] sm:$0x3]
      %v2208 = vperm.slane %v2206, 0
      %v2209 = vperm.slane %v2206, 1
      %2210 = vrot.lane.b32.xlu0 %v2208, 16
      %v2211 = vpop.permute.xlu0 %2210
      %2212 = vrot.lane.b32.xlu0 %v2209, 16
      %v2213 = vpop.permute.xlu0 %2212
      %v2214 = vsel %vm849, %v2211, %v2213
      %v2218 = vmul.f32 %v2166, %v2211
      %v2219 = vmul.f32 %v2162, %v2214
      %v2220 = vmul.f32 %v2167, %v2213
      %v2221 = vld [vmem:[%s857] sm:$0x3]
      %v2223 = vperm.slane %v2221, 0
      %v2224 = vperm.slane %v2221, 1
      %2225 = vrot.lane.b32.xlu0 %v2223, 17
      %v2226 = vpop.permute.xlu0 %2225
      %2227 = vrot.lane.b32.xlu0 %v2224, 17
      %v2228 = vpop.permute.xlu0 %2227
      %v2229 = vsel %vm791, %v2226, %v2228
      %v2233 = vmul.f32 %v2166, %v2226
      %v2234 = vmul.f32 %v2162, %v2229
      %v2235 = vmul.f32 %v2167, %v2228
      %v2236 = vld [vmem:[%s873] sm:$0x3]
      %v2238 = vperm.slane %v2236, 0
      %v2239 = vperm.slane %v2236, 1
      %2240 = vrot.lane.b32.xlu0 %v2238, 18
      %v2241 = vpop.permute.xlu0 %2240
      %2242 = vrot.lane.b32.xlu0 %v2239, 18
      %v2243 = vpop.permute.xlu0 %2242
      %v2244 = vsel %vm882, %v2241, %v2243
      %v2248 = vmul.f32 %v2166, %v2241
      %v2249 = vmul.f32 %v2162, %v2244
      %v2250 = vmul.f32 %v2167, %v2243
      %v2251 = vld [vmem:[%s890] sm:$0x3]
      %v2253 = vperm.slane %v2251, 0
      %v2254 = vperm.slane %v2251, 1
      %2255 = vrot.lane.b32.xlu0 %v2253, 32
      %v2256 = vpop.permute.xlu0 %2255
      %2257 = vrot.lane.b32.xlu0 %v2254, 32
      %v2258 = vpop.permute.xlu0 %2257
      %v2259 = vsel %vm899, %v2256, %v2258
      %v2263 = vmul.f32 %v2166, %v2256
      %v2264 = vmul.f32 %v2162, %v2259
      %v2265 = vmul.f32 %v2167, %v2258
      %v2266 = vld [vmem:[%s907] sm:$0x3]
      %v2268 = vperm.slane %v2266, 0
      %v2269 = vperm.slane %v2266, 1
      %2270 = vrot.lane.b32.xlu0 %v2268, 33
      %v2271 = vpop.permute.xlu0 %2270
      %2272 = vrot.lane.b32.xlu0 %v2269, 33
      %v2273 = vpop.permute.xlu0 %2272
      %v2274 = vsel %vm916, %v2271, %v2273
      %v2278 = vmul.f32 %v2166, %v2271
      %v2279 = vmul.f32 %v2162, %v2274
      %v2280 = vmul.f32 %v2167, %v2273
      %v2281 = vld [vmem:[%s924] sm:$0x3]
      %v2283 = vperm.slane %v2281, 0
      %v2284 = vperm.slane %v2281, 1
      %2285 = vrot.lane.b32.xlu0 %v2283, 34
      %v2286 = vpop.permute.xlu0 %2285
      %2287 = vrot.lane.b32.xlu0 %v2284, 34
      %v2288 = vpop.permute.xlu0 %2287
      %v2289 = vsel %vm933, %v2286, %v2288
      %v2293 = vmul.f32 %v2166, %v2286
      %v2294 = vmul.f32 %v2162, %v2289
      %v2295 = vmul.f32 %v2167, %v2288
      %2299 = vrot.lane.b32.xlu0 %v2188, 127
      %v2300 = vpop.permute.xlu0 %2299
      %2301 = vrot.lane.b32.xlu0 %v2189, 127
      %v2302 = vpop.permute.xlu0 %2301
      %2303 = vrot.lane.b32.xlu0 %v2190, 127
      %v2304 = vpop.permute.xlu0 %2303
      %v2305 = vsel %vm950, %v2300, %v2302
      %v2306 = vsel %vm950, %v2302, %v2304
      %2312 = vrot.lane.b32.xlu0 %v2203, 126
      %v2313 = vpop.permute.xlu0 %2312
      %2314 = vrot.lane.b32.xlu0 %v2204, 126
      %v2315 = vpop.permute.xlu0 %2314
      %2316 = vrot.lane.b32.xlu0 %v2205, 126
      %v2317 = vpop.permute.xlu0 %2316
      %v2318 = vsel %vm964, %v2313, %v2315
      %v2319 = vsel %vm964, %v2315, %v2317
      %2325 = vrot.lane.b32.xlu0 %v2218, 112
      %v2326 = vpop.permute.xlu0 %2325
      %2327 = vrot.lane.b32.xlu0 %v2219, 112
      %v2328 = vpop.permute.xlu0 %2327
      %2329 = vrot.lane.b32.xlu0 %v2220, 112
      %v2330 = vpop.permute.xlu0 %2329
      %v2331 = vsel %vm978, %v2326, %v2328
      %v2332 = vsel %vm978, %v2328, %v2330
      %2338 = vrot.lane.b32.xlu0 %v2233, 111
      %v2339 = vpop.permute.xlu0 %2338
      %2340 = vrot.lane.b32.xlu0 %v2234, 111
      %v2341 = vpop.permute.xlu0 %2340
      %2342 = vrot.lane.b32.xlu0 %v2235, 111
      %v2343 = vpop.permute.xlu0 %2342
      %v2344 = vsel %vm992, %v2339, %v2341
      %v2345 = vsel %vm992, %v2341, %v2343
      %2351 = vrot.lane.b32.xlu0 %v2248, 110
      %v2352 = vpop.permute.xlu0 %2351
      %2353 = vrot.lane.b32.xlu0 %v2249, 110
      %v2354 = vpop.permute.xlu0 %2353
      %2355 = vrot.lane.b32.xlu0 %v2250, 110
      %v2356 = vpop.permute.xlu0 %2355
      %v2357 = vsel %vm1006, %v2352, %v2354
      %v2358 = vsel %vm1006, %v2354, %v2356
      %2364 = vrot.lane.b32.xlu0 %v2263, 96
      %v2365 = vpop.permute.xlu0 %2364
      %2366 = vrot.lane.b32.xlu0 %v2264, 96
      %v2367 = vpop.permute.xlu0 %2366
      %2368 = vrot.lane.b32.xlu0 %v2265, 96
      %v2369 = vpop.permute.xlu0 %2368
      %v2370 = vsel %vm1020, %v2365, %v2367
      %v2371 = vsel %vm1020, %v2367, %v2369
      %2377 = vrot.lane.b32.xlu0 %v2278, 95
      %v2378 = vpop.permute.xlu0 %2377
      %2379 = vrot.lane.b32.xlu0 %v2279, 95
      %v2380 = vpop.permute.xlu0 %2379
      %2381 = vrot.lane.b32.xlu0 %v2280, 95
      %v2382 = vpop.permute.xlu0 %2381
      %v2383 = vsel %vm1034, %v2378, %v2380
      %v2384 = vsel %vm1034, %v2380, %v2382
      %2390 = vrot.lane.b32.xlu0 %v2293, 94
      %v2391 = vpop.permute.xlu0 %2390
      %2392 = vrot.lane.b32.xlu0 %v2294, 94
      %v2393 = vpop.permute.xlu0 %2392
      %2394 = vrot.lane.b32.xlu0 %v2295, 94
      %v2395 = vpop.permute.xlu0 %2394
      %v2396 = vsel %vm1048, %v2391, %v2393
      %v2397 = vsel %vm1048, %v2393, %v2395
      %2400 = vmatpush.msra.mxu0 0.0
      %2401 = vmatpush.msra.mxu0 0.0
      %2402 = vmatpush.msra.mxu0 0.0
      %2403 = vmatpush.msra.mxu0 0.0
      %2404 = vmatpush.msra.mxu0 0.0
      %2405 = vmatpush.msra.mxu0 0.0
      %2406 = vmatpush.msra.mxu0 0.0
      %2407 = vmatpush.msra.mxu0 %v2396
      %2408 = vmatpush.msra.mxu0 %v2383
      %2409 = vmatpush.msra.mxu0 %v2370
      %2410 = vmatpush.msra.mxu0 %v2357
      %2411 = vmatpush.msra.mxu0 %v2344
      %2412 = vmatpush.msra.mxu0 %v2331
      %2413 = vmatpush.msra.mxu0 %v2318
      %2414 = vmatpush.msra.mxu0 %v2305
      %2415 = vmatpush.msra.mxu0 %v2174
      %2416 = vmatmul.f32.gmra.mxu0 %v1055
      %v2417 = vpop.f32.mrf.mxu0
      %v2418 = vadd.f32 0.0, %v2417
      %2419 = vdwg.mxu0
      %2420 = vmatpush.msra.mxu0 0.0
      %2421 = vmatpush.msra.mxu0 0.0
      %2422 = vmatpush.msra.mxu0 0.0
      %2423 = vmatpush.msra.mxu0 0.0
      %2424 = vmatpush.msra.mxu0 0.0
      %2425 = vmatpush.msra.mxu0 0.0
      %2426 = vmatpush.msra.mxu0 0.0
      %2427 = vmatpush.msra.mxu0 %v2397
      %2428 = vmatpush.msra.mxu0 %v2384
      %2429 = vmatpush.msra.mxu0 %v2371
      %2430 = vmatpush.msra.mxu0 %v2358
      %2431 = vmatpush.msra.mxu0 %v2345
      %2432 = vmatpush.msra.mxu0 %v2332
      %2433 = vmatpush.msra.mxu0 %v2319
      %2434 = vmatpush.msra.mxu0 %v2306
      %2435 = vmatpush.msra.mxu0 %v2175
      %2436 = vmatmul.f32.gmra.mxu0 %v1055
      %v2437 = vpop.f32.mrf.mxu0
      %v2438 = vadd.f32 0.0, %v2437
      %2439 = vdwg.mxu0
      %s2440 = scalar_lea.vmem %s617, 48
      %2441 = vst [vmem:[%s2440] sm:$0xff] %v2418
      %2442 = vst [vmem:[%s2440 + $0x8] sm:$0xff] %v2438
      %s2443 = smul.u32 4, %s25
      %p2444 = scmp.lt.s32.totalorder %s24, 1
      %s2445 = scalar_select %p2444, %s24, 1
      %p2446 = scmp.lt.s32.totalorder %s2443, 7
      %s2447 = scalar_select %p2446, %s2443, 7
      %s2448 = smul.addr %s2447, 2
      %s2449 = smul.addr %s2445, 16
      %s2450 = sadd.s32 %s2448, %s2449
      %s2451 = smul.addr %s2450, 8
      %s2452 = scalar_lea.vmem %s9, %s2451
      // Predicated region
      $region57: #{sepconv_pd_forward.1} parent=55 // pred_check
        %p2453 = pneg %p305
      $region58: #{sepconv_pd_forward.1} parent=55 // pred_check_branch
        %2455 = sbr.rel (%p2453) target = $region60
      $region59: #{sepconv_pd_forward.1} parent=55 // pred_region
        %s2456 = smul.u32 4, %s25
      $region60: #{sepconv_pd_forward.1} parent=55 // pred_fallthru
        _
    $region56: #{sepconv_pd_forward.1} parent=5 // pred_fallthru
      _
    %p2457 = scmp.le.s32.totalorder 2, %s15
    // Predicated region
    $region61: #{sepconv_pd_forward.1} parent=5 // pred_check
      %p2458 = pneg %p2457
    $region62: #{sepconv_pd_forward.1} parent=5 // pred_check_branch
      %2460 = sbr.rel (%p2458) target = $region64
    $region63: #{sepconv_pd_forward.1} parent=5 // pred_region
      %s2461 = ssub.s32 %s15, 2
      // Predicated region
      $region65: #{sepconv_pd_forward.1} parent=63 // pred_check
        %p2462 = pneg %p311
      $region66: #{sepconv_pd_forward.1} parent=63 // pred_check_branch
        %2464 = sbr.rel (%p2462) target = $region68
      $region67: #{sepconv_pd_forward.1} parent=63 // pred_region
        %s2465 = smul.u32 4, %s27
        %p2466 = scmp.lt.s32.totalorder %s26, 1
        %s2467 = scalar_select %p2466, %s26, 1
        %p2468 = scmp.lt.s32.totalorder %s2465, 7
        %s2469 = scalar_select %p2468, %s2465, 7
        %s2470 = smul.addr %s2469, 2
        %s2471 = smul.addr %s2467, 16
        %s2472 = sadd.s32 %s2470, %s2471
        %s2473 = smul.addr %s2472, 8
        %s2474 = scalar_lea.vmem %s9, %s2473
      $region68: #{sepconv_pd_forward.1} parent=63 // pred_fallthru
        _
    $region64: #{sepconv_pd_forward.1} parent=5 // pred_fallthru
      _
  $region6: #{sepconv_pd_forward.1} parent=0 // loop_footer
    %s19 = sadd.s32 1, %s15
  $region7: #{sepconv_pd_forward.1} parent=0 // loop_footer_branch
    %14 = sbr.rel target = $region3
  $region8: #{sepconv_pd_forward.1} parent=0 // loop_exit
    _

</llo_original>
